<compile_context>
chip_gen: v5e
topology: v5e:2x2
jax: 0.10.0
libtpu: 0.0.40
codegen_flags: <defaults>
</compile_context>

<pallas_src>
import functools

import jax
import jax.numpy as jnp
from jax.experimental import pallas as pl
from jax.experimental.pallas import tpu as pltpu


def _layer_norm(v, gamma, beta, eps=1e-5):
    mu = jnp.mean(v, axis=-1, keepdims=True)
    var = jnp.mean((v - mu) ** 2, axis=-1, keepdims=True)
    return (v - mu) * jax.lax.rsqrt(var + eps) * gamma + beta


def _mha(q_in, kv_in, mask_bool,
         wq, bq, wk, bk, wv, bv, wfc, bfc, ln_g, ln_b,
         attn_ref, ctx_ref, *, n_head, d_k, d_v):
    """Multi-head attention + residual + LayerNorm.

    q_in: (Bt, Lq, D) f32   kv_in: (Bt, Lk, D) f32   mask_bool: (Bt, Lq, Lk) bool
    attn_ref: (H, Bt, Lq, Lk) output ref (head-major) or None.
    ctx_ref:  (Bt*Lq, H*dv) f32 VMEM scratch holding the per-head context slabs.
    Matmul operands are bf16; accumulation / softmax / LayerNorm are f32.
    """
    bt, lq, d = q_in.shape
    lk = kv_in.shape[1]
    inv_temp = 1.0 / jnp.sqrt(jnp.float32(d_k))

    q2 = q_in.reshape(bt * lq, d)            # f32, kept for the residual
    kv2 = kv_in.reshape(bt * lk, d)
    q2b = q2.astype(jnp.bfloat16)
    kv2b = kv2.astype(jnp.bfloat16)

    # Fused full-width projections (D-wide contraction on the MXU, bf16 inputs).
    qp = jnp.dot(q2b, wq, preferred_element_type=jnp.float32) + bq    # (Bt*Lq, H*dk)
    kp = jnp.dot(kv2b, wk, preferred_element_type=jnp.float32) + bk   # (Bt*Lk, H*dk)
    vp = jnp.dot(kv2b, wv, preferred_element_type=jnp.float32) + bv   # (Bt*Lk, H*dv)

    # Static per-head loop (n_head is small).  Each head's context is written
    # directly into the ctx scratch slab so only one head's intermediates stay
    # live at a time (no Python-list concat, no inflated vreg pressure).
    for h in range(n_head):
        qh = qp[:, h * d_k:(h + 1) * d_k].reshape(bt, lq, d_k).astype(jnp.bfloat16)
        kh = kp[:, h * d_k:(h + 1) * d_k].reshape(bt, lk, d_k).astype(jnp.bfloat16)
        vh = vp[:, h * d_v:(h + 1) * d_v].reshape(bt, lk, d_v).astype(jnp.bfloat16)

        scores = jnp.einsum("bqd,bkd->bqk", qh, kh,
                            preferred_element_type=jnp.float32) * inv_temp
        # TODO(synk): reference masked_fill uses -inf (NaN rows when fully
        # masked); -1e9 + max-subtraction keeps masked rows finite/uniform.
        scores = jnp.where(mask_bool, jnp.float32(-1e9), scores)
        scores = scores - jnp.max(scores, axis=-1, keepdims=True)
        e = jnp.exp(scores)
        attn = e / jnp.sum(e, axis=-1, keepdims=True)      # exact f32 softmax
        if attn_ref is not None:
            attn_ref[h] = attn.astype(attn_ref.dtype)      # head-major layout

        ctx = jnp.einsum("bqk,bkd->bqd", attn.astype(jnp.bfloat16), vh,
                         preferred_element_type=jnp.float32)
        ctx_ref[:, h * d_v:(h + 1) * d_v] = ctx.reshape(bt * lq, d_v)

    # Single fused output projection over the concatenated heads (bf16 MXU).
    out = jnp.dot(ctx_ref[...].astype(jnp.bfloat16), wfc,
                  preferred_element_type=jnp.float32) + bfc
    out = _layer_norm(out + q2, ln_g, ln_b)
    return out.reshape(bt, lq, d)


def _decoder_layer_kernel(
    dec_ref, enc_ref, npm_ref, smask_ref, emask_ref,
    # self-attention params
    swq_ref, sbq_ref, swk_ref, sbk_ref, swv_ref, sbv_ref, swfc_ref, sbfc_ref,
    sln_g_ref, sln_b_ref,
    # encoder-decoder attention params
    ewq_ref, ebq_ref, ewk_ref, ebk_ref, ewv_ref, ebv_ref, ewfc_ref, ebfc_ref,
    eln_g_ref, eln_b_ref,
    # feed-forward params
    w1_ref, b1_ref, w2_ref, b2_ref, fln_g_ref, fln_b_ref,
    # outputs (+ optional attention maps), then scratch
    out_ref, *tail,
    n_head, d_k, d_v, return_attn,
):
    if return_attn:
        sattn_ref, eattn_ref, ctx_ref = tail
    else:
        (ctx_ref,) = tail
        sattn_ref = eattn_ref = None

    x = dec_ref[...].astype(jnp.float32)      # (Bt, Lq, D)
    enc = enc_ref[...].astype(jnp.float32)    # (Bt, Lk, D)
    npm = npm_ref[...].astype(jnp.float32)    # (Bt, Lq, 1)
    # Hoisted int8->bool mask compares (computed once, reused across heads).
    smask = smask_ref[...] != 0               # (Bt, Lq, Lq)
    emask = emask_ref[...] != 0               # (Bt, Lq, Lk)

    bt, lq, d = x.shape

    # --- self attention (+residual, +LayerNorm), then non_pad_mask ---
    y = _mha(x, x, smask,
             swq_ref[...], sbq_ref[...], swk_ref[...], sbk_ref[...],
             swv_ref[...], sbv_ref[...], swfc_ref[...], sbfc_ref[...],
             sln_g_ref[...], sln_b_ref[...], sattn_ref, ctx_ref,
             n_head=n_head, d_k=d_k, d_v=d_v)
    y = y * npm

    # --- encoder-decoder attention (+residual, +LayerNorm), then non_pad_mask ---
    z = _mha(y, enc, emask,
             ewq_ref[...], ebq_ref[...], ewk_ref[...], ebk_ref[...],
             ewv_ref[...], ebv_ref[...], ewfc_ref[...], ebfc_ref[...],
             eln_g_ref[...], eln_b_ref[...], eattn_ref, ctx_ref,
             n_head=n_head, d_k=d_k, d_v=d_v)
    z = z * npm

    # --- position-wise FFN (Conv1d k=1 == matmul) + residual + LayerNorm ---
    z2 = z.reshape(bt * lq, d)
    h1 = jnp.maximum(
        jnp.dot(z2.astype(jnp.bfloat16), w1_ref[...],
                preferred_element_type=jnp.float32) + b1_ref[...], 0.0)
    h2 = jnp.dot(h1.astype(jnp.bfloat16), w2_ref[...],
                 preferred_element_type=jnp.float32) + b2_ref[...]
    o = _layer_norm(h2 + z2, fln_g_ref[...], fln_b_ref[...])
    out_ref[...] = (o.reshape(bt, lq, d) * npm).astype(out_ref.dtype)


def _pick_batch_tile(batch, seq_len, target_rows=512):
    """Largest divisor of `batch` with bt*seq_len <= target_rows (fills the MXU
    M dim without blowing VMEM).  No forced >=2 grid steps: on single-TC chips
    (v5e/v6e) the extra step is pure overhead; on v7x pass batch_tile explicitly
    to keep >=2 parallel steps for the two TensorCores."""
    best = 1
    for cand in range(1, batch + 1):
        if batch % cand == 0 and cand * seq_len <= target_rows:
            best = cand
    return best


def _estimate_vmem_bytes(bt, lq, lk, d, d_inner, n_head, d_k, d_v,
                         attn_bytes, return_attn):
    """Rough per-step VMEM footprint: double-buffered activation/mask/output
    blocks + single-buffered bf16 weights + scratch + live intermediates."""
    def tile(r, c, elem):                       # rough (8,128) tile padding
        return max(r, 8) * max(c, 128) * elem

    act_in = (bt * tile(lq, d, 4) + bt * tile(lk, d, 4) + bt * tile(lq, 1, 4)
              + bt * tile(lq, lq, 1) + bt * tile(lq, lk, 1))
    weights = (2 * (2 * tile(d, n_head * d_k, 2) + tile(d, n_head * d_v, 2)
                    + tile(n_head * d_v, d, 2))
               + tile(d, d_inner, 2) + tile(d_inner, d, 2))
    small = (2 * (2 * tile(1, n_head * d_k, 4) + tile(1, n_head * d_v, 4)
                  + 4 * tile(1, d, 4))
             + tile(1, d_inner, 4) + 3 * tile(1, d, 4))
    act_out = bt * tile(lq, d, 4)
    if return_attn:
        act_out += n_head * bt * (tile(lq, lq, attn_bytes) + tile(lq, lk, attn_bytes))
    scratch = tile(bt * lq, n_head * d_v, 4)
    live = (6 * bt * tile(lq, max(lq, lk), 4)
            + 4 * tile(bt * lq, max(n_head * d_k, n_head * d_v, d_inner, d), 4))
    return 2 * (act_in + act_out) + weights + small + scratch + live


def t_decoder_layer(dec_input, enc_output, non_pad_mask, slf_attn_mask,
                    dec_enc_attn_mask, params, *, n_head, d_k, d_v,
                    batch_tile=None, attn_dtype=jnp.bfloat16, return_attn=True):
    """dec_input: (B, Lq, D); enc_output: (B, Lk, D); non_pad_mask: (B, Lq, 1);
    slf_attn_mask: (B, Lq, Lq); dec_enc_attn_mask: (B, Lq, Lk).  Nonzero mask
    entries are masked out (as in PyTorch masked_fill)."""
    B, Lq, D = dec_input.shape
    Lk = enc_output.shape[1]
    d_inner = params["w1"].shape[1]

    bt = _pick_batch_tile(B, Lq) if batch_tile is None else batch_tile
    assert B % bt == 0
    grid = (B // bt,)

    # Masks travel as int8 (4x less DMA / VMEM than f32); nonzero => masked.
    smask_i8 = (slf_attn_mask != 0).astype(jnp.int8)
    emask_i8 = (dec_enc_attn_mask != 0).astype(jnp.int8)

    # Matmul weights cast to bf16 once at the boundary; biases / LN stay f32.
    bfw = lambda name: params[name].astype(jnp.bfloat16)
    f32p = lambda name: params[name].astype(jnp.float32)

    # Constant block index + single buffering: fetched once, stays VMEM-resident
    # at 1x its size (default double-buffering would cost 2x).
    wspec = lambda shape: pl.BlockSpec(shape, lambda i: (0, 0),
                                       pipeline_mode=pl.Buffered(1))

    attn_w_specs = [
        wspec((D, n_head * d_k)), wspec((1, n_head * d_k)),   # wq, bq
        wspec((D, n_head * d_k)), wspec((1, n_head * d_k)),   # wk, bk
        wspec((D, n_head * d_v)), wspec((1, n_head * d_v)),   # wv, bv
        wspec((n_head * d_v, D)), wspec((1, D)),               # wfc, bfc
        wspec((1, D)), wspec((1, D)),                           # ln gamma, beta
    ]

    in_specs = [
        pl.BlockSpec((bt, Lq, D), lambda i: (i, 0, 0)),    # dec_input
        pl.BlockSpec((bt, Lk, D), lambda i: (i, 0, 0)),    # enc_output
        pl.BlockSpec((bt, Lq, 1), lambda i: (i, 0, 0)),    # non_pad_mask
        pl.BlockSpec((bt, Lq, Lq), lambda i: (i, 0, 0)),   # slf_attn_mask (i8)
        pl.BlockSpec((bt, Lq, Lk), lambda i: (i, 0, 0)),   # dec_enc_attn_mask (i8)
    ] + attn_w_specs + attn_w_specs + [
        wspec((D, d_inner)), wspec((1, d_inner)),           # w1, b1
        wspec((d_inner, D)), wspec((1, D)),                  # w2, b2
        wspec((1, D)), wspec((1, D)),                         # ffn ln gamma, beta
    ]

    out_shapes = [jax.ShapeDtypeStruct((B, Lq, D), jnp.float32)]
    out_specs = [pl.BlockSpec((bt, Lq, D), lambda i: (i, 0, 0))]
    if return_attn:
        out_shapes += [jax.ShapeDtypeStruct((n_head, B, Lq, Lq), attn_dtype),
                       jax.ShapeDtypeStruct((n_head, B, Lq, Lk), attn_dtype)]
        out_specs += [pl.BlockSpec((n_head, bt, Lq, Lq), lambda i: (0, i, 0, 0)),
                      pl.BlockSpec((n_head, bt, Lq, Lk), lambda i: (0, i, 0, 0))]

    attn_bytes = jnp.dtype(attn_dtype).itemsize
    vmem_limit = int(min(
        64 * 2**20,                                   # also fits v7x physical VMEM
        max(16 * 2**20,
            2 * _estimate_vmem_bytes(bt, Lq, Lk, D, d_inner, n_head, d_k, d_v,
                                     attn_bytes, return_attn))))

    kernel = functools.partial(_decoder_layer_kernel, n_head=n_head, d_k=d_k,
                               d_v=d_v, return_attn=return_attn)

    results = pl.pallas_call(
        kernel,
        out_shape=tuple(out_shapes),
        grid_spec=pltpu.PrefetchScalarGridSpec(
            num_scalar_prefetch=0,
            grid=grid,
            in_specs=in_specs,
            out_specs=out_specs,
            scratch_shapes=[pltpu.VMEM((bt * Lq, n_head * d_v), jnp.float32)],
        ),
        compiler_params=pltpu.CompilerParams(
            dimension_semantics=("parallel",),
            vmem_limit_bytes=vmem_limit),
    )(
        dec_input, enc_output, non_pad_mask.astype(jnp.float32),
        smask_i8, emask_i8,
        bfw("s_wq"), f32p("s_bq"), bfw("s_wk"), f32p("s_bk"),
        bfw("s_wv"), f32p("s_bv"), bfw("s_wfc"), f32p("s_bfc"),
        f32p("s_ln_g"), f32p("s_ln_b"),
        bfw("e_wq"), f32p("e_bq"), bfw("e_wk"), f32p("e_bk"),
        bfw("e_wv"), f32p("e_bv"), bfw("e_wfc"), f32p("e_bfc"),
        f32p("e_ln_g"), f32p("e_ln_b"),
        bfw("w1"), f32p("b1"), bfw("w2"), f32p("b2"),
        f32p("f_ln_g"), f32p("f_ln_b"),
    )

    if return_attn:
        out, sattn, eattn = results
        # Kernel already wrote (H, B, Lq, Lk) head-major; this reshape is a free,
        # contiguous view — no extra HBM transpose pass.
        dec_slf_attn = sattn.reshape(n_head * B, Lq, Lq)
        dec_enc_attn = eattn.reshape(n_head * B, Lq, Lk)
        return out, dec_slf_attn, dec_enc_attn
    (out,) = results
    return out, None, None


def init_params(key, d_model, d_inner, n_head, d_k, d_v):
    ks = jax.random.split(key, 10)
    s = lambda fan_in: 1.0 / jnp.sqrt(jnp.float32(fan_in))

    def attn_block(k0, k1, k2, k3, prefix):
        return {
            f"{prefix}_wq": jax.random.normal(k0, (d_model, n_head * d_k), jnp.float32) * s(d_model),
            f"{prefix}_bq": jnp.zeros((1, n_head * d_k), jnp.float32),
            f"{prefix}_wk": jax.random.normal(k1, (d_model, n_head * d_k), jnp.float32) * s(d_model),
            f"{prefix}_bk": jnp.zeros((1, n_head * d_k), jnp.float32),
            f"{prefix}_wv": jax.random.normal(k2, (d_model, n_head * d_v), jnp.float32) * s(d_model),
            f"{prefix}_bv": jnp.zeros((1, n_head * d_v), jnp.float32),
            f"{prefix}_wfc": jax.random.normal(k3, (n_head * d_v, d_model), jnp.float32) * s(n_head * d_v),
            f"{prefix}_bfc": jnp.zeros((1, d_model), jnp.float32),
            f"{prefix}_ln_g": jnp.ones((1, d_model), jnp.float32),
            f"{prefix}_ln_b": jnp.zeros((1, d_model), jnp.float32),
        }

    p = {}
    p.update(attn_block(ks[0], ks[1], ks[2], ks[3], "s"))   # self-attention
    p.update(attn_block(ks[4], ks[5], ks[6], ks[7], "e"))   # enc-dec attention
    p.update({
        # Conv1d(d_model, d_inner, 1).weight is (d_inner, d_model, 1); stored here
        # already transposed to (d_model, d_inner) for x @ W1.
        "w1": jax.random.normal(ks[8], (d_model, d_inner), jnp.float32) * s(d_model),
        "b1": jnp.zeros((1, d_inner), jnp.float32),
        "w2": jax.random.normal(ks[9], (d_inner, d_model), jnp.float32) * s(d_inner),
        "b2": jnp.zeros((1, d_model), jnp.float32),
        "f_ln_g": jnp.ones((1, d_model), jnp.float32),
        "f_ln_b": jnp.zeros((1, d_model), jnp.float32),
    })
    return p


if __name__ == "__main__":
    B, Lq, Lk = 2, 8, 16
    d_model, d_inner, n_head, d_k, d_v = 32, 64, 2, 16, 16

    key = jax.random.PRNGKey(0)
    k_dec, k_enc, k_p = jax.random.split(key, 3)

    dec_input = jax.random.normal(k_dec, (B, Lq, d_model), jnp.float32)
    enc_output = jax.random.normal(k_enc, (B, Lk, d_model), jnp.float32)

    # non_pad_mask: (B, Lq, 1); last two decoder positions of batch 1 are padding.
    non_pad = jnp.ones((B, Lq, 1), jnp.float32)
    non_pad = non_pad.at[1, -2:, 0].set(0.0)
    # slf_attn_mask: causal (subsequent) mask, nonzero => masked key position.
    causal = jnp.triu(jnp.ones((Lq, Lq), jnp.float32), k=1)
    slf_mask = jnp.broadcast_to(causal, (B, Lq, Lq))
    # dec_enc_attn_mask: mask out the last 4 encoder positions for batch 1.
    enc_mask = jnp.zeros((B, Lq, Lk), jnp.float32)
    enc_mask = enc_mask.at[1, :, -4:].set(1.0)

    params = init_params(k_p, d_model, d_inner, n_head, d_k, d_v)

    dec_out, dec_slf_attn, dec_enc_attn = t_decoder_layer(
        dec_input, enc_output, non_pad, slf_mask, enc_mask, params,
        n_head=n_head, d_k=d_k, d_v=d_v,
    )
    jax.block_until_ready((dec_out, dec_slf_attn, dec_enc_attn))

    assert dec_out.shape == (B, Lq, d_model)
    assert dec_slf_attn.shape == (n_head * B, Lq, Lq)
    assert dec_enc_attn.shape == (n_head * B, Lq, Lk)
    assert bool(jnp.all(jnp.isfinite(dec_out)))
    assert bool(jnp.all(jnp.isfinite(dec_slf_attn.astype(jnp.float32))))
    assert bool(jnp.all(jnp.isfinite(dec_enc_attn.astype(jnp.float32))))
    # Softmax rows should sum to ~1 (exact f32 softmax, bf16 storage rounding).
    row_s = jnp.sum(dec_slf_attn.astype(jnp.float32), axis=-1)
    row_e = jnp.sum(dec_enc_attn.astype(jnp.float32), axis=-1)
    assert bool(jnp.max(jnp.abs(row_s - 1.0)) < 5e-2)
    assert bool(jnp.max(jnp.abs(row_e - 1.0)) < 5e-2)
    print("KERNEL_OK")
</pallas_src>

<mosaic_0001>
module attributes {stable_mosaic.version = 11 : i64} {
  func.func @_decoder_layer_kernel(%arg0: i32, %arg1: memref<2x8x32xf32, #tpu.memory_space<vmem>>, %arg2: memref<2x16x32xf32, #tpu.memory_space<vmem>>, %arg3: memref<2x8x1xf32, #tpu.memory_space<vmem>>, %arg4: memref<2x8x8xi8, #tpu.memory_space<vmem>>, %arg5: memref<2x8x16xi8, #tpu.memory_space<vmem>>, %arg6: memref<32x32xbf16, #tpu.memory_space<vmem>>, %arg7: memref<1x32xf32, #tpu.memory_space<vmem>>, %arg8: memref<32x32xbf16, #tpu.memory_space<vmem>>, %arg9: memref<1x32xf32, #tpu.memory_space<vmem>>, %arg10: memref<32x32xbf16, #tpu.memory_space<vmem>>, %arg11: memref<1x32xf32, #tpu.memory_space<vmem>>, %arg12: memref<32x32xbf16, #tpu.memory_space<vmem>>, %arg13: memref<1x32xf32, #tpu.memory_space<vmem>>, %arg14: memref<1x32xf32, #tpu.memory_space<vmem>>, %arg15: memref<1x32xf32, #tpu.memory_space<vmem>>, %arg16: memref<32x32xbf16, #tpu.memory_space<vmem>>, %arg17: memref<1x32xf32, #tpu.memory_space<vmem>>, %arg18: memref<32x32xbf16, #tpu.memory_space<vmem>>, %arg19: memref<1x32xf32, #tpu.memory_space<vmem>>, %arg20: memref<32x32xbf16, #tpu.memory_space<vmem>>, %arg21: memref<1x32xf32, #tpu.memory_space<vmem>>, %arg22: memref<32x32xbf16, #tpu.memory_space<vmem>>, %arg23: memref<1x32xf32, #tpu.memory_space<vmem>>, %arg24: memref<1x32xf32, #tpu.memory_space<vmem>>, %arg25: memref<1x32xf32, #tpu.memory_space<vmem>>, %arg26: memref<32x64xbf16, #tpu.memory_space<vmem>>, %arg27: memref<1x64xf32, #tpu.memory_space<vmem>>, %arg28: memref<64x32xbf16, #tpu.memory_space<vmem>>, %arg29: memref<1x32xf32, #tpu.memory_space<vmem>>, %arg30: memref<1x32xf32, #tpu.memory_space<vmem>>, %arg31: memref<1x32xf32, #tpu.memory_space<vmem>>, %arg32: memref<2x8x32xf32, #tpu.memory_space<vmem>>, %arg33: memref<2x2x8x8xbf16, #tpu.memory_space<vmem>>, %arg34: memref<2x2x8x16xbf16, #tpu.memory_space<vmem>>, %arg35: memref<16x32xf32, #tpu.memory_space<vmem>>) attributes {dimension_semantics = [#tpu.dimension_semantics<parallel>], iteration_bounds = array<i64: 1>, scalar_prefetch = 0 : i64, scratch_operands = 1 : i64, tpu.core_type = #tpu.core_type<tc>, window_params = [{transform_indices = @transform_0, window_bounds = array<i64: 2, 8, 32>}, {transform_indices = @transform_1, window_bounds = array<i64: 2, 16, 32>}, {transform_indices = @transform_2, window_bounds = array<i64: 2, 8, 1>}, {transform_indices = @transform_3, window_bounds = array<i64: 2, 8, 8>}, {transform_indices = @transform_4, window_bounds = array<i64: 2, 8, 16>}, {pipeline_mode = #tpu.pipeline_mode<synchronous>, transform_indices = @transform_5, window_bounds = array<i64: 32, 32>}, {pipeline_mode = #tpu.pipeline_mode<synchronous>, transform_indices = @transform_6, window_bounds = array<i64: 1, 32>}, {pipeline_mode = #tpu.pipeline_mode<synchronous>, transform_indices = @transform_7, window_bounds = array<i64: 32, 32>}, {pipeline_mode = #tpu.pipeline_mode<synchronous>, transform_indices = @transform_8, window_bounds = array<i64: 1, 32>}, {pipeline_mode = #tpu.pipeline_mode<synchronous>, transform_indices = @transform_9, window_bounds = array<i64: 32, 32>}, {pipeline_mode = #tpu.pipeline_mode<synchronous>, transform_indices = @transform_10, window_bounds = array<i64: 1, 32>}, {pipeline_mode = #tpu.pipeline_mode<synchronous>, transform_indices = @transform_11, window_bounds = array<i64: 32, 32>}, {pipeline_mode = #tpu.pipeline_mode<synchronous>, transform_indices = @transform_12, window_bounds = array<i64: 1, 32>}, {pipeline_mode = #tpu.pipeline_mode<synchronous>, transform_indices = @transform_13, window_bounds = array<i64: 1, 32>}, {pipeline_mode = #tpu.pipeline_mode<synchronous>, transform_indices = @transform_14, window_bounds = array<i64: 1, 32>}, {pipeline_mode = #tpu.pipeline_mode<synchronous>, transform_indices = @transform_15, window_bounds = array<i64: 32, 32>}, {pipeline_mode = #tpu.pipeline_mode<synchronous>, transform_indices = @transform_16, window_bounds = array<i64: 1, 32>}, {pipeline_mode = #tpu.pipeline_mode<synchronous>, transform_indices = @transform_17, window_bounds = array<i64: 32, 32>}, {pipeline_mode = #tpu.pipeline_mode<synchronous>, transform_indices = @transform_18, window_bounds = array<i64: 1, 32>}, {pipeline_mode = #tpu.pipeline_mode<synchronous>, transform_indices = @transform_19, window_bounds = array<i64: 32, 32>}, {pipeline_mode = #tpu.pipeline_mode<synchronous>, transform_indices = @transform_20, window_bounds = array<i64: 1, 32>}, {pipeline_mode = #tpu.pipeline_mode<synchronous>, transform_indices = @transform_21, window_bounds = array<i64: 32, 32>}, {pipeline_mode = #tpu.pipeline_mode<synchronous>, transform_indices = @transform_22, window_bounds = array<i64: 1, 32>}, {pipeline_mode = #tpu.pipeline_mode<synchronous>, transform_indices = @transform_23, window_bounds = array<i64: 1, 32>}, {pipeline_mode = #tpu.pipeline_mode<synchronous>, transform_indices = @transform_24, window_bounds = array<i64: 1, 32>}, {pipeline_mode = #tpu.pipeline_mode<synchronous>, transform_indices = @transform_25, window_bounds = array<i64: 32, 64>}, {pipeline_mode = #tpu.pipeline_mode<synchronous>, transform_indices = @transform_26, window_bounds = array<i64: 1, 64>}, {pipeline_mode = #tpu.pipeline_mode<synchronous>, transform_indices = @transform_27, window_bounds = array<i64: 64, 32>}, {pipeline_mode = #tpu.pipeline_mode<synchronous>, transform_indices = @transform_28, window_bounds = array<i64: 1, 32>}, {pipeline_mode = #tpu.pipeline_mode<synchronous>, transform_indices = @transform_29, window_bounds = array<i64: 1, 32>}, {pipeline_mode = #tpu.pipeline_mode<synchronous>, transform_indices = @transform_30, window_bounds = array<i64: 1, 32>}, {transform_indices = @transform_31, window_bounds = array<i64: 2, 8, 32>}, {transform_indices = @transform_32, window_bounds = array<i64: 2, 2, 8, 8>}, {transform_indices = @transform_33, window_bounds = array<i64: 2, 2, 8, 16>}]} {
    %c0 = arith.constant 0 : index
    %c0_0 = arith.constant 0 : index
    %c0_1 = arith.constant 0 : index
    %0 = vector.load %arg1[%c0, %c0_0, %c0_1] : memref<2x8x32xf32, #tpu.memory_space<vmem>>, vector<2x8x32xf32>
    %c0_2 = arith.constant 0 : index
    %c0_3 = arith.constant 0 : index
    %c0_4 = arith.constant 0 : index
    %1 = vector.load %arg2[%c0_2, %c0_3, %c0_4] : memref<2x16x32xf32, #tpu.memory_space<vmem>>, vector<2x16x32xf32>
    %c0_5 = arith.constant 0 : index
    %c0_6 = arith.constant 0 : index
    %c0_7 = arith.constant 0 : index
    %2 = vector.load %arg3[%c0_5, %c0_6, %c0_7] : memref<2x8x1xf32, #tpu.memory_space<vmem>>, vector<2x8x1xf32>
    %c0_8 = arith.constant 0 : index
    %c0_9 = arith.constant 0 : index
    %c0_10 = arith.constant 0 : index
    %3 = vector.load %arg4[%c0_8, %c0_9, %c0_10] : memref<2x8x8xi8, #tpu.memory_space<vmem>>, vector<2x8x8xi8>
    %c0_i8 = arith.constant 0 : i8
    %4 = vector.broadcast %c0_i8 : i8 to vector<2x8x8xi8>
    %5 = arith.cmpi ne, %3, %4 : vector<2x8x8xi8>
    %c0_11 = arith.constant 0 : index
    %c0_12 = arith.constant 0 : index
    %c0_13 = arith.constant 0 : index
    %6 = vector.load %arg5[%c0_11, %c0_12, %c0_13] : memref<2x8x16xi8, #tpu.memory_space<vmem>>, vector<2x8x16xi8>
    %c0_i8_14 = arith.constant 0 : i8
    %7 = vector.broadcast %c0_i8_14 : i8 to vector<2x8x16xi8>
    %8 = arith.cmpi ne, %6, %7 : vector<2x8x16xi8>
    %c0_15 = arith.constant 0 : index
    %c0_16 = arith.constant 0 : index
    %9 = vector.load %arg6[%c0_15, %c0_16] : memref<32x32xbf16, #tpu.memory_space<vmem>>, vector<32x32xbf16>
    %c0_17 = arith.constant 0 : index
    %c0_18 = arith.constant 0 : index
    %10 = vector.load %arg7[%c0_17, %c0_18] : memref<1x32xf32, #tpu.memory_space<vmem>>, vector<1x32xf32>
    %c0_19 = arith.constant 0 : index
    %c0_20 = arith.constant 0 : index
    %11 = vector.load %arg8[%c0_19, %c0_20] : memref<32x32xbf16, #tpu.memory_space<vmem>>, vector<32x32xbf16>
    %c0_21 = arith.constant 0 : index
    %c0_22 = arith.constant 0 : index
    %12 = vector.load %arg9[%c0_21, %c0_22] : memref<1x32xf32, #tpu.memory_space<vmem>>, vector<1x32xf32>
    %c0_23 = arith.constant 0 : index
    %c0_24 = arith.constant 0 : index
    %13 = vector.load %arg10[%c0_23, %c0_24] : memref<32x32xbf16, #tpu.memory_space<vmem>>, vector<32x32xbf16>
    %c0_25 = arith.constant 0 : index
    %c0_26 = arith.constant 0 : index
    %14 = vector.load %arg11[%c0_25, %c0_26] : memref<1x32xf32, #tpu.memory_space<vmem>>, vector<1x32xf32>
    %c0_27 = arith.constant 0 : index
    %c0_28 = arith.constant 0 : index
    %15 = vector.load %arg12[%c0_27, %c0_28] : memref<32x32xbf16, #tpu.memory_space<vmem>>, vector<32x32xbf16>
    %c0_29 = arith.constant 0 : index
    %c0_30 = arith.constant 0 : index
    %16 = vector.load %arg13[%c0_29, %c0_30] : memref<1x32xf32, #tpu.memory_space<vmem>>, vector<1x32xf32>
    %c0_31 = arith.constant 0 : index
    %c0_32 = arith.constant 0 : index
    %17 = vector.load %arg14[%c0_31, %c0_32] : memref<1x32xf32, #tpu.memory_space<vmem>>, vector<1x32xf32>
    %c0_33 = arith.constant 0 : index
    %c0_34 = arith.constant 0 : index
    %18 = vector.load %arg15[%c0_33, %c0_34] : memref<1x32xf32, #tpu.memory_space<vmem>>, vector<1x32xf32>
    %cst = arith.constant 1.600000e+01 : f32
    %19 = math.sqrt %cst : f32
    %cst_35 = arith.constant 1.000000e+00 : f32
    %20 = arith.divf %cst_35, %19 : f32
    %21 = vector.shape_cast %0 : vector<2x8x32xf32> to vector<16x32xf32>
    %22 = vector.shape_cast %0 : vector<2x8x32xf32> to vector<16x32xf32>
    %23 = arith.truncf %21 : vector<16x32xf32> to vector<16x32xbf16>
    %24 = arith.truncf %22 : vector<16x32xf32> to vector<16x32xbf16>
    %cst_36 = arith.constant dense<0.000000e+00> : vector<16x32xf32>
    %25 = tpu.matmul %23, %9, %cst_36 {dimension_numbers = #tpu.dot_dimension_numbers<[1], [0], [0], [1], [0, 0, 1, 1], [], []>} : vector<16x32xbf16>, vector<32x32xbf16>, vector<16x32xf32> -> vector<16x32xf32>
    %26 = vector.broadcast %10 : vector<1x32xf32> to vector<16x32xf32>
    %27 = arith.addf %25, %26 : vector<16x32xf32>
    %cst_37 = arith.constant dense<0.000000e+00> : vector<16x32xf32>
    %28 = tpu.matmul %24, %11, %cst_37 {dimension_numbers = #tpu.dot_dimension_numbers<[1], [0], [0], [1], [0, 0, 1, 1], [], []>} : vector<16x32xbf16>, vector<32x32xbf16>, vector<16x32xf32> -> vector<16x32xf32>
    %29 = vector.broadcast %12 : vector<1x32xf32> to vector<16x32xf32>
    %30 = arith.addf %28, %29 : vector<16x32xf32>
    %cst_38 = arith.constant dense<0.000000e+00> : vector<16x32xf32>
    %31 = tpu.matmul %24, %13, %cst_38 {dimension_numbers = #tpu.dot_dimension_numbers<[1], [0], [0], [1], [0, 0, 1, 1], [], []>} : vector<16x32xbf16>, vector<32x32xbf16>, vector<16x32xf32> -> vector<16x32xf32>
    %32 = vector.broadcast %14 : vector<1x32xf32> to vector<16x32xf32>
    %33 = arith.addf %31, %32 : vector<16x32xf32>
    %34 = vector.extract_strided_slice %27 {offsets = [0, 0], sizes = [16, 16], strides = [1, 1]} : vector<16x32xf32> to vector<16x16xf32>
    %35 = vector.shape_cast %34 : vector<16x16xf32> to vector<2x8x16xf32>
    %36 = arith.truncf %35 : vector<2x8x16xf32> to vector<2x8x16xbf16>
    %37 = vector.extract_strided_slice %30 {offsets = [0, 0], sizes = [16, 16], strides = [1, 1]} : vector<16x32xf32> to vector<16x16xf32>
    %38 = vector.shape_cast %37 : vector<16x16xf32> to vector<2x8x16xf32>
    %39 = arith.truncf %38 : vector<2x8x16xf32> to vector<2x8x16xbf16>
    %40 = vector.extract_strided_slice %33 {offsets = [0, 0], sizes = [16, 16], strides = [1, 1]} : vector<16x32xf32> to vector<16x16xf32>
    %41 = vector.shape_cast %40 : vector<16x16xf32> to vector<2x8x16xf32>
    %42 = arith.truncf %41 : vector<2x8x16xf32> to vector<2x8x16xbf16>
    "tpu.trace_start"() <{level = 10 : i32, message = "bqd,bkd->bqk"}> : () -> ()
    %cst_39 = arith.constant dense<0.000000e+00> : vector<2x8x8xf32>
    %43 = tpu.matmul %36, %39, %cst_39 {dimension_numbers = #tpu.dot_dimension_numbers<[2], [2], [1], [1], [0, 0, 0, 1, 1, 1], [0], [0]>} : vector<2x8x16xbf16>, vector<2x8x16xbf16>, vector<2x8x8xf32> -> vector<2x8x8xf32>
    "tpu.trace_stop"() : () -> ()
    %44 = vector.broadcast %20 : f32 to vector<2x8x8xf32>
    %45 = arith.mulf %43, %44 : vector<2x8x8xf32>
    %cst_40 = arith.constant -1.000000e+09 : f32
    %46 = vector.broadcast %cst_40 : f32 to vector<2x8x8xf32>
    %47 = arith.select %5, %46, %45 : vector<2x8x8xi1>, vector<2x8x8xf32>
    %cst_41 = arith.constant dense<0xFF800000> : vector<2x8xf32>
    %48 = vector.multi_reduction <maximumf>, %47, %cst_41 [2] : vector<2x8x8xf32> to vector<2x8xf32>
    %49 = vector.shape_cast %48 : vector<2x8xf32> to vector<2x8x1xf32>
    %50 = vector.broadcast %49 : vector<2x8x1xf32> to vector<2x8x8xf32>
    %51 = arith.subf %47, %50 : vector<2x8x8xf32>
    %52 = math.exp %51 : vector<2x8x8xf32>
    %cst_42 = arith.constant dense<0.000000e+00> : vector<2x8xf32>
    %53 = vector.multi_reduction <add>, %52, %cst_42 [2] : vector<2x8x8xf32> to vector<2x8xf32>
    %54 = vector.shape_cast %53 : vector<2x8xf32> to vector<2x8x1xf32>
    %55 = vector.broadcast %54 : vector<2x8x1xf32> to vector<2x8x8xf32>
    %56 = arith.divf %52, %55 : vector<2x8x8xf32>
    %57 = arith.truncf %56 : vector<2x8x8xf32> to vector<2x8x8xbf16>
    %c0_43 = arith.constant 0 : index
    %c0_44 = arith.constant 0 : index
    %c0_45 = arith.constant 0 : index
    %c0_46 = arith.constant 0 : index
    %58 = vector.load %arg33[%c0_43, %c0_44, %c0_45, %c0_46] : memref<2x2x8x8xbf16, #tpu.memory_space<vmem>>, vector<1x2x8x8xbf16>
    %59 = vector.shape_cast %58 : vector<1x2x8x8xbf16> to vector<2x8x8xbf16>
    %60 = vector.shape_cast %57 : vector<2x8x8xbf16> to vector<1x2x8x8xbf16>
    tpu.vector_store %arg33[%c0_43, %c0_44, %c0_45, %c0_46], %60 {strides = array<i32>} : memref<2x2x8x8xbf16, #tpu.memory_space<vmem>>, vector<1x2x8x8xbf16>,
    %61 = arith.truncf %56 : vector<2x8x8xf32> to vector<2x8x8xbf16>
    "tpu.trace_start"() <{level = 10 : i32, message = "bqk,bkd->bqd"}> : () -> ()
    %cst_47 = arith.constant dense<0.000000e+00> : vector<2x8x16xf32>
    %62 = tpu.matmul %61, %42, %cst_47 {dimension_numbers = #tpu.dot_dimension_numbers<[2], [1], [1], [2], [0, 0, 0, 1, 1, 2], [0], [0]>} : vector<2x8x8xbf16>, vector<2x8x16xbf16>, vector<2x8x16xf32> -> vector<2x8x16xf32>
    "tpu.trace_stop"() : () -> ()
    %63 = vector.shape_cast %62 : vector<2x8x16xf32> to vector<16x16xf32>
    %c0_48 = arith.constant 0 : index
    %c0_49 = arith.constant 0 : index
    %64 = vector.load %arg35[%c0_48, %c0_49] : memref<16x32xf32, #tpu.memory_space<vmem>>, vector<16x16xf32>
    tpu.vector_store %arg35[%c0_48, %c0_49], %63 {strides = array<i32>} : memref<16x32xf32, #tpu.memory_space<vmem>>, vector<16x16xf32>,
    %65 = vector.extract_strided_slice %27 {offsets = [0, 16], sizes = [16, 16], strides = [1, 1]} : vector<16x32xf32> to vector<16x16xf32>
    %66 = vector.shape_cast %65 : vector<16x16xf32> to vector<2x8x16xf32>
    %67 = arith.truncf %66 : vector<2x8x16xf32> to vector<2x8x16xbf16>
    %68 = vector.extract_strided_slice %30 {offsets = [0, 16], sizes = [16, 16], strides = [1, 1]} : vector<16x32xf32> to vector<16x16xf32>
    %69 = vector.shape_cast %68 : vector<16x16xf32> to vector<2x8x16xf32>
    %70 = arith.truncf %69 : vector<2x8x16xf32> to vector<2x8x16xbf16>
    %71 = vector.extract_strided_slice %33 {offsets = [0, 16], sizes = [16, 16], strides = [1, 1]} : vector<16x32xf32> to vector<16x16xf32>
    %72 = vector.shape_cast %71 : vector<16x16xf32> to vector<2x8x16xf32>
    %73 = arith.truncf %72 : vector<2x8x16xf32> to vector<2x8x16xbf16>
    "tpu.trace_start"() <{level = 10 : i32, message = "bqd,bkd->bqk"}> : () -> ()
    %cst_50 = arith.constant dense<0.000000e+00> : vector<2x8x8xf32>
    %74 = tpu.matmul %67, %70, %cst_50 {dimension_numbers = #tpu.dot_dimension_numbers<[2], [2], [1], [1], [0, 0, 0, 1, 1, 1], [0], [0]>} : vector<2x8x16xbf16>, vector<2x8x16xbf16>, vector<2x8x8xf32> -> vector<2x8x8xf32>
    "tpu.trace_stop"() : () -> ()
    %75 = vector.broadcast %20 : f32 to vector<2x8x8xf32>
    %76 = arith.mulf %74, %75 : vector<2x8x8xf32>
    %cst_51 = arith.constant -1.000000e+09 : f32
    %77 = vector.broadcast %cst_51 : f32 to vector<2x8x8xf32>
    %78 = arith.select %5, %77, %76 : vector<2x8x8xi1>, vector<2x8x8xf32>
    %cst_52 = arith.constant dense<0xFF800000> : vector<2x8xf32>
    %79 = vector.multi_reduction <maximumf>, %78, %cst_52 [2] : vector<2x8x8xf32> to vector<2x8xf32>
    %80 = vector.shape_cast %79 : vector<2x8xf32> to vector<2x8x1xf32>
    %81 = vector.broadcast %80 : vector<2x8x1xf32> to vector<2x8x8xf32>
    %82 = arith.subf %78, %81 : vector<2x8x8xf32>
    %83 = math.exp %82 : vector<2x8x8xf32>
    %cst_53 = arith.constant dense<0.000000e+00> : vector<2x8xf32>
    %84 = vector.multi_reduction <add>, %83, %cst_53 [2] : vector<2x8x8xf32> to vector<2x8xf32>
    %85 = vector.shape_cast %84 : vector<2x8xf32> to vector<2x8x1xf32>
    %86 = vector.broadcast %85 : vector<2x8x1xf32> to vector<2x8x8xf32>
    %87 = arith.divf %83, %86 : vector<2x8x8xf32>
    %88 = arith.truncf %87 : vector<2x8x8xf32> to vector<2x8x8xbf16>
    %c1 = arith.constant 1 : index
    %c0_54 = arith.constant 0 : index
    %c0_55 = arith.constant 0 : index
    %c0_56 = arith.constant 0 : index
    %89 = vector.load %arg33[%c1, %c0_54, %c0_55, %c0_56] : memref<2x2x8x8xbf16, #tpu.memory_space<vmem>>, vector<1x2x8x8xbf16>
    %90 = vector.shape_cast %89 : vector<1x2x8x8xbf16> to vector<2x8x8xbf16>
    %91 = vector.shape_cast %88 : vector<2x8x8xbf16> to vector<1x2x8x8xbf16>
    tpu.vector_store %arg33[%c1, %c0_54, %c0_55, %c0_56], %91 {strides = array<i32>} : memref<2x2x8x8xbf16, #tpu.memory_space<vmem>>, vector<1x2x8x8xbf16>,
    %92 = arith.truncf %87 : vector<2x8x8xf32> to vector<2x8x8xbf16>
    "tpu.trace_start"() <{level = 10 : i32, message = "bqk,bkd->bqd"}> : () -> ()
    %cst_57 = arith.constant dense<0.000000e+00> : vector<2x8x16xf32>
    %93 = tpu.matmul %92, %73, %cst_57 {dimension_numbers = #tpu.dot_dimension_numbers<[2], [1], [1], [2], [0, 0, 0, 1, 1, 2], [0], [0]>} : vector<2x8x8xbf16>, vector<2x8x16xbf16>, vector<2x8x16xf32> -> vector<2x8x16xf32>
    "tpu.trace_stop"() : () -> ()
    %94 = vector.shape_cast %93 : vector<2x8x16xf32> to vector<16x16xf32>
    %c0_58 = arith.constant 0 : index
    %c16 = arith.constant 16 : index
    %95 = vector.load %arg35[%c0_58, %c16] : memref<16x32xf32, #tpu.memory_space<vmem>>, vector<16x16xf32>
    tpu.vector_store %arg35[%c0_58, %c16], %94 {strides = array<i32>} : memref<16x32xf32, #tpu.memory_space<vmem>>, vector<16x16xf32>,
    %c0_59 = arith.constant 0 : index
    %c0_60 = arith.constant 0 : index
    %96 = vector.load %arg35[%c0_59, %c0_60] : memref<16x32xf32, #tpu.memory_space<vmem>>, vector<16x32xf32>
    %97 = arith.truncf %96 : vector<16x32xf32> to vector<16x32xbf16>
    %cst_61 = arith.constant dense<0.000000e+00> : vector<16x32xf32>
    %98 = tpu.matmul %97, %15, %cst_61 {dimension_numbers = #tpu.dot_dimension_numbers<[1], [0], [0], [1], [0, 0, 1, 1], [], []>} : vector<16x32xbf16>, vector<32x32xbf16>, vector<16x32xf32> -> vector<16x32xf32>
    %99 = vector.broadcast %16 : vector<1x32xf32> to vector<16x32xf32>
    %100 = arith.addf %98, %99 : vector<16x32xf32>
    %101 = arith.addf %100, %21 : vector<16x32xf32>
    %cst_62 = arith.constant dense<0.000000e+00> : vector<16xf32>
    %102 = vector.multi_reduction <add>, %101, %cst_62 [1] : vector<16x32xf32> to vector<16xf32>
    %103 = vector.shape_cast %102 : vector<16xf32> to vector<16x1xf32>
    %cst_63 = arith.constant 3.200000e+01 : f32
    %104 = vector.broadcast %cst_63 : f32 to vector<16x1xf32>
    %105 = arith.divf %103, %104 : vector<16x1xf32>
    %106 = vector.broadcast %105 : vector<16x1xf32> to vector<16x32xf32>
    %107 = arith.subf %101, %106 : vector<16x32xf32>
    %108 = arith.mulf %107, %107 : vector<16x32xf32>
    %cst_64 = arith.constant dense<0.000000e+00> : vector<16xf32>
    %109 = vector.multi_reduction <add>, %108, %cst_64 [1] : vector<16x32xf32> to vector<16xf32>
    %110 = vector.shape_cast %109 : vector<16xf32> to vector<16x1xf32>
    %cst_65 = arith.constant 3.200000e+01 : f32
    %111 = vector.broadcast %cst_65 : f32 to vector<16x1xf32>
    %112 = arith.divf %110, %111 : vector<16x1xf32>
    %113 = vector.broadcast %105 : vector<16x1xf32> to vector<16x32xf32>
    %114 = arith.subf %101, %113 : vector<16x32xf32>
    %cst_66 = arith.constant 9.99999974E-6 : f32
    %115 = vector.broadcast %cst_66 : f32 to vector<16x1xf32>
    %116 = arith.addf %112, %115 : vector<16x1xf32>
    %117 = math.rsqrt %116 : vector<16x1xf32>
    %118 = vector.broadcast %117 : vector<16x1xf32> to vector<16x32xf32>
    %119 = arith.mulf %114, %118 : vector<16x32xf32>
    %120 = vector.broadcast %17 : vector<1x32xf32> to vector<16x32xf32>
    %121 = arith.mulf %119, %120 : vector<16x32xf32>
    %122 = vector.broadcast %18 : vector<1x32xf32> to vector<16x32xf32>
    %123 = arith.addf %121, %122 : vector<16x32xf32>
    %124 = vector.shape_cast %123 : vector<16x32xf32> to vector<2x8x32xf32>
    %125 = vector.broadcast %2 : vector<2x8x1xf32> to vector<2x8x32xf32>
    %126 = arith.mulf %124, %125 : vector<2x8x32xf32>
    %c0_67 = arith.constant 0 : index
    %c0_68 = arith.constant 0 : index
    %127 = vector.load %arg16[%c0_67, %c0_68] : memref<32x32xbf16, #tpu.memory_space<vmem>>, vector<32x32xbf16>
    %c0_69 = arith.constant 0 : index
    %c0_70 = arith.constant 0 : index
    %128 = vector.load %arg17[%c0_69, %c0_70] : memref<1x32xf32, #tpu.memory_space<vmem>>, vector<1x32xf32>
    %c0_71 = arith.constant 0 : index
    %c0_72 = arith.constant 0 : index
    %129 = vector.load %arg18[%c0_71, %c0_72] : memref<32x32xbf16, #tpu.memory_space<vmem>>, vector<32x32xbf16>
    %c0_73 = arith.constant 0 : index
    %c0_74 = arith.constant 0 : index
    %130 = vector.load %arg19[%c0_73, %c0_74] : memref<1x32xf32, #tpu.memory_space<vmem>>, vector<1x32xf32>
    %c0_75 = arith.constant 0 : index
    %c0_76 = arith.constant 0 : index
    %131 = vector.load %arg20[%c0_75, %c0_76] : memref<32x32xbf16, #tpu.memory_space<vmem>>, vector<32x32xbf16>
    %c0_77 = arith.constant 0 : index
    %c0_78 = arith.constant 0 : index
    %132 = vector.load %arg21[%c0_77, %c0_78] : memref<1x32xf32, #tpu.memory_space<vmem>>, vector<1x32xf32>
    %c0_79 = arith.constant 0 : index
    %c0_80 = arith.constant 0 : index
    %133 = vector.load %arg22[%c0_79, %c0_80] : memref<32x32xbf16, #tpu.memory_space<vmem>>, vector<32x32xbf16>
    %c0_81 = arith.constant 0 : index
    %c0_82 = arith.constant 0 : index
    %134 = vector.load %arg23[%c0_81, %c0_82] : memref<1x32xf32, #tpu.memory_space<vmem>>, vector<1x32xf32>
    %c0_83 = arith.constant 0 : index
    %c0_84 = arith.constant 0 : index
    %135 = vector.load %arg24[%c0_83, %c0_84] : memref<1x32xf32, #tpu.memory_space<vmem>>, vector<1x32xf32>
    %c0_85 = arith.constant 0 : index
    %c0_86 = arith.constant 0 : index
    %136 = vector.load %arg25[%c0_85, %c0_86] : memref<1x32xf32, #tpu.memory_space<vmem>>, vector<1x32xf32>
    %cst_87 = arith.constant 1.600000e+01 : f32
    %137 = math.sqrt %cst_87 : f32
    %cst_88 = arith.constant 1.000000e+00 : f32
    %138 = arith.divf %cst_88, %137 : f32
    %139 = vector.shape_cast %126 : vector<2x8x32xf32> to vector<16x32xf32>
    %140 = vector.shape_cast %1 : vector<2x16x32xf32> to vector<32x32xf32>
    %141 = arith.truncf %139 : vector<16x32xf32> to vector<16x32xbf16>
    %142 = arith.truncf %140 : vector<32x32xf32> to vector<32x32xbf16>
    %cst_89 = arith.constant dense<0.000000e+00> : vector<16x32xf32>
    %143 = tpu.matmul %141, %127, %cst_89 {dimension_numbers = #tpu.dot_dimension_numbers<[1], [0], [0], [1], [0, 0, 1, 1], [], []>} : vector<16x32xbf16>, vector<32x32xbf16>, vector<16x32xf32> -> vector<16x32xf32>
    %144 = vector.broadcast %128 : vector<1x32xf32> to vector<16x32xf32>
    %145 = arith.addf %143, %144 : vector<16x32xf32>
    %cst_90 = arith.constant dense<0.000000e+00> : vector<32x32xf32>
    %146 = tpu.matmul %142, %129, %cst_90 {dimension_numbers = #tpu.dot_dimension_numbers<[1], [0], [0], [1], [0, 0, 1, 1], [], []>} : vector<32x32xbf16>, vector<32x32xbf16>, vector<32x32xf32> -> vector<32x32xf32>
    %147 = vector.broadcast %130 : vector<1x32xf32> to vector<32x32xf32>
    %148 = arith.addf %146, %147 : vector<32x32xf32>
    %cst_91 = arith.constant dense<0.000000e+00> : vector<32x32xf32>
    %149 = tpu.matmul %142, %131, %cst_91 {dimension_numbers = #tpu.dot_dimension_numbers<[1], [0], [0], [1], [0, 0, 1, 1], [], []>} : vector<32x32xbf16>, vector<32x32xbf16>, vector<32x32xf32> -> vector<32x32xf32>
    %150 = vector.broadcast %132 : vector<1x32xf32> to vector<32x32xf32>
    %151 = arith.addf %149, %150 : vector<32x32xf32>
    %152 = vector.extract_strided_slice %145 {offsets = [0, 0], sizes = [16, 16], strides = [1, 1]} : vector<16x32xf32> to vector<16x16xf32>
    %153 = vector.shape_cast %152 : vector<16x16xf32> to vector<2x8x16xf32>
    %154 = arith.truncf %153 : vector<2x8x16xf32> to vector<2x8x16xbf16>
    %155 = vector.extract_strided_slice %148 {offsets = [0, 0], sizes = [32, 16], strides = [1, 1]} : vector<32x32xf32> to vector<32x16xf32>
    %156 = vector.shape_cast %155 : vector<32x16xf32> to vector<2x16x16xf32>
    %157 = arith.truncf %156 : vector<2x16x16xf32> to vector<2x16x16xbf16>
    %158 = vector.extract_strided_slice %151 {offsets = [0, 0], sizes = [32, 16], strides = [1, 1]} : vector<32x32xf32> to vector<32x16xf32>
    %159 = vector.shape_cast %158 : vector<32x16xf32> to vector<2x16x16xf32>
    %160 = arith.truncf %159 : vector<2x16x16xf32> to vector<2x16x16xbf16>
    "tpu.trace_start"() <{level = 10 : i32, message = "bqd,bkd->bqk"}> : () -> ()
    %cst_92 = arith.constant dense<0.000000e+00> : vector<2x8x16xf32>
    %161 = tpu.matmul %154, %157, %cst_92 {dimension_numbers = #tpu.dot_dimension_numbers<[2], [2], [1], [1], [0, 0, 0, 1, 1, 1], [0], [0]>} : vector<2x8x16xbf16>, vector<2x16x16xbf16>, vector<2x8x16xf32> -> vector<2x8x16xf32>
    "tpu.trace_stop"() : () -> ()
    %162 = vector.broadcast %138 : f32 to vector<2x8x16xf32>
    %163 = arith.mulf %161, %162 : vector<2x8x16xf32>
    %cst_93 = arith.constant -1.000000e+09 : f32
    %164 = vector.broadcast %cst_93 : f32 to vector<2x8x16xf32>
    %165 = arith.select %8, %164, %163 : vector<2x8x16xi1>, vector<2x8x16xf32>
    %cst_94 = arith.constant dense<0xFF800000> : vector<2x8xf32>
    %166 = vector.multi_reduction <maximumf>, %165, %cst_94 [2] : vector<2x8x16xf32> to vector<2x8xf32>
    %167 = vector.shape_cast %166 : vector<2x8xf32> to vector<2x8x1xf32>
    %168 = vector.broadcast %167 : vector<2x8x1xf32> to vector<2x8x16xf32>
    %169 = arith.subf %165, %168 : vector<2x8x16xf32>
    %170 = math.exp %169 : vector<2x8x16xf32>
    %cst_95 = arith.constant dense<0.000000e+00> : vector<2x8xf32>
    %171 = vector.multi_reduction <add>, %170, %cst_95 [2] : vector<2x8x16xf32> to vector<2x8xf32>
    %172 = vector.shape_cast %171 : vector<2x8xf32> to vector<2x8x1xf32>
    %173 = vector.broadcast %172 : vector<2x8x1xf32> to vector<2x8x16xf32>
    %174 = arith.divf %170, %173 : vector<2x8x16xf32>
    %175 = arith.truncf %174 : vector<2x8x16xf32> to vector<2x8x16xbf16>
    %c0_96 = arith.constant 0 : index
    %c0_97 = arith.constant 0 : index
    %c0_98 = arith.constant 0 : index
    %c0_99 = arith.constant 0 : index
    %176 = vector.load %arg34[%c0_96, %c0_97, %c0_98, %c0_99] : memref<2x2x8x16xbf16, #tpu.memory_space<vmem>>, vector<1x2x8x16xbf16>
    %177 = vector.shape_cast %176 : vector<1x2x8x16xbf16> to vector<2x8x16xbf16>
    %178 = vector.shape_cast %175 : vector<2x8x16xbf16> to vector<1x2x8x16xbf16>
    tpu.vector_store %arg34[%c0_96, %c0_97, %c0_98, %c0_99], %178 {strides = array<i32>} : memref<2x2x8x16xbf16, #tpu.memory_space<vmem>>, vector<1x2x8x16xbf16>,
    %179 = arith.truncf %174 : vector<2x8x16xf32> to vector<2x8x16xbf16>
    "tpu.trace_start"() <{level = 10 : i32, message = "bqk,bkd->bqd"}> : () -> ()
    %cst_100 = arith.constant dense<0.000000e+00> : vector<2x8x16xf32>
    %180 = tpu.matmul %179, %160, %cst_100 {dimension_numbers = #tpu.dot_dimension_numbers<[2], [1], [1], [2], [0, 0, 0, 1, 1, 2], [0], [0]>} : vector<2x8x16xbf16>, vector<2x16x16xbf16>, vector<2x8x16xf32> -> vector<2x8x16xf32>
    "tpu.trace_stop"() : () -> ()
    %181 = vector.shape_cast %180 : vector<2x8x16xf32> to vector<16x16xf32>
    %c0_101 = arith.constant 0 : index
    %c0_102 = arith.constant 0 : index
    %182 = vector.load %arg35[%c0_101, %c0_102] : memref<16x32xf32, #tpu.memory_space<vmem>>, vector<16x16xf32>
    tpu.vector_store %arg35[%c0_101, %c0_102], %181 {strides = array<i32>} : memref<16x32xf32, #tpu.memory_space<vmem>>, vector<16x16xf32>,
    %183 = vector.extract_strided_slice %145 {offsets = [0, 16], sizes = [16, 16], strides = [1, 1]} : vector<16x32xf32> to vector<16x16xf32>
    %184 = vector.shape_cast %183 : vector<16x16xf32> to vector<2x8x16xf32>
    %185 = arith.truncf %184 : vector<2x8x16xf32> to vector<2x8x16xbf16>
    %186 = vector.extract_strided_slice %148 {offsets = [0, 16], sizes = [32, 16], strides = [1, 1]} : vector<32x32xf32> to vector<32x16xf32>
    %187 = vector.shape_cast %186 : vector<32x16xf32> to vector<2x16x16xf32>
    %188 = arith.truncf %187 : vector<2x16x16xf32> to vector<2x16x16xbf16>
    %189 = vector.extract_strided_slice %151 {offsets = [0, 16], sizes = [32, 16], strides = [1, 1]} : vector<32x32xf32> to vector<32x16xf32>
    %190 = vector.shape_cast %189 : vector<32x16xf32> to vector<2x16x16xf32>
    %191 = arith.truncf %190 : vector<2x16x16xf32> to vector<2x16x16xbf16>
    "tpu.trace_start"() <{level = 10 : i32, message = "bqd,bkd->bqk"}> : () -> ()
    %cst_103 = arith.constant dense<0.000000e+00> : vector<2x8x16xf32>
    %192 = tpu.matmul %185, %188, %cst_103 {dimension_numbers = #tpu.dot_dimension_numbers<[2], [2], [1], [1], [0, 0, 0, 1, 1, 1], [0], [0]>} : vector<2x8x16xbf16>, vector<2x16x16xbf16>, vector<2x8x16xf32> -> vector<2x8x16xf32>
    "tpu.trace_stop"() : () -> ()
    %193 = vector.broadcast %138 : f32 to vector<2x8x16xf32>
    %194 = arith.mulf %192, %193 : vector<2x8x16xf32>
    %cst_104 = arith.constant -1.000000e+09 : f32
    %195 = vector.broadcast %cst_104 : f32 to vector<2x8x16xf32>
    %196 = arith.select %8, %195, %194 : vector<2x8x16xi1>, vector<2x8x16xf32>
    %cst_105 = arith.constant dense<0xFF800000> : vector<2x8xf32>
    %197 = vector.multi_reduction <maximumf>, %196, %cst_105 [2] : vector<2x8x16xf32> to vector<2x8xf32>
    %198 = vector.shape_cast %197 : vector<2x8xf32> to vector<2x8x1xf32>
    %199 = vector.broadcast %198 : vector<2x8x1xf32> to vector<2x8x16xf32>
    %200 = arith.subf %196, %199 : vector<2x8x16xf32>
    %201 = math.exp %200 : vector<2x8x16xf32>
    %cst_106 = arith.constant dense<0.000000e+00> : vector<2x8xf32>
    %202 = vector.multi_reduction <add>, %201, %cst_106 [2] : vector<2x8x16xf32> to vector<2x8xf32>
    %203 = vector.shape_cast %202 : vector<2x8xf32> to vector<2x8x1xf32>
    %204 = vector.broadcast %203 : vector<2x8x1xf32> to vector<2x8x16xf32>
    %205 = arith.divf %201, %204 : vector<2x8x16xf32>
    %206 = arith.truncf %205 : vector<2x8x16xf32> to vector<2x8x16xbf16>
    %c1_107 = arith.constant 1 : index
    %c0_108 = arith.constant 0 : index
    %c0_109 = arith.constant 0 : index
    %c0_110 = arith.constant 0 : index
    %207 = vector.load %arg34[%c1_107, %c0_108, %c0_109, %c0_110] : memref<2x2x8x16xbf16, #tpu.memory_space<vmem>>, vector<1x2x8x16xbf16>
    %208 = vector.shape_cast %207 : vector<1x2x8x16xbf16> to vector<2x8x16xbf16>
    %209 = vector.shape_cast %206 : vector<2x8x16xbf16> to vector<1x2x8x16xbf16>
    tpu.vector_store %arg34[%c1_107, %c0_108, %c0_109, %c0_110], %209 {strides = array<i32>} : memref<2x2x8x16xbf16, #tpu.memory_space<vmem>>, vector<1x2x8x16xbf16>,
    %210 = arith.truncf %205 : vector<2x8x16xf32> to vector<2x8x16xbf16>
    "tpu.trace_start"() <{level = 10 : i32, message = "bqk,bkd->bqd"}> : () -> ()
    %cst_111 = arith.constant dense<0.000000e+00> : vector<2x8x16xf32>
    %211 = tpu.matmul %210, %191, %cst_111 {dimension_numbers = #tpu.dot_dimension_numbers<[2], [1], [1], [2], [0, 0, 0, 1, 1, 2], [0], [0]>} : vector<2x8x16xbf16>, vector<2x16x16xbf16>, vector<2x8x16xf32> -> vector<2x8x16xf32>
    "tpu.trace_stop"() : () -> ()
    %212 = vector.shape_cast %211 : vector<2x8x16xf32> to vector<16x16xf32>
    %c0_112 = arith.constant 0 : index
    %c16_113 = arith.constant 16 : index
    %213 = vector.load %arg35[%c0_112, %c16_113] : memref<16x32xf32, #tpu.memory_space<vmem>>, vector<16x16xf32>
    tpu.vector_store %arg35[%c0_112, %c16_113], %212 {strides = array<i32>} : memref<16x32xf32, #tpu.memory_space<vmem>>, vector<16x16xf32>,
    %c0_114 = arith.constant 0 : index
    %c0_115 = arith.constant 0 : index
    %214 = vector.load %arg35[%c0_114, %c0_115] : memref<16x32xf32, #tpu.memory_space<vmem>>, vector<16x32xf32>
    %215 = arith.truncf %214 : vector<16x32xf32> to vector<16x32xbf16>
    %cst_116 = arith.constant dense<0.000000e+00> : vector<16x32xf32>
    %216 = tpu.matmul %215, %133, %cst_116 {dimension_numbers = #tpu.dot_dimension_numbers<[1], [0], [0], [1], [0, 0, 1, 1], [], []>} : vector<16x32xbf16>, vector<32x32xbf16>, vector<16x32xf32> -> vector<16x32xf32>
    %217 = vector.broadcast %134 : vector<1x32xf32> to vector<16x32xf32>
    %218 = arith.addf %216, %217 : vector<16x32xf32>
    %219 = arith.addf %218, %139 : vector<16x32xf32>
    %cst_117 = arith.constant dense<0.000000e+00> : vector<16xf32>
    %220 = vector.multi_reduction <add>, %219, %cst_117 [1] : vector<16x32xf32> to vector<16xf32>
    %221 = vector.shape_cast %220 : vector<16xf32> to vector<16x1xf32>
    %cst_118 = arith.constant 3.200000e+01 : f32
    %222 = vector.broadcast %cst_118 : f32 to vector<16x1xf32>
    %223 = arith.divf %221, %222 : vector<16x1xf32>
    %224 = vector.broadcast %223 : vector<16x1xf32> to vector<16x32xf32>
    %225 = arith.subf %219, %224 : vector<16x32xf32>
    %226 = arith.mulf %225, %225 : vector<16x32xf32>
    %cst_119 = arith.constant dense<0.000000e+00> : vector<16xf32>
    %227 = vector.multi_reduction <add>, %226, %cst_119 [1] : vector<16x32xf32> to vector<16xf32>
    %228 = vector.shape_cast %227 : vector<16xf32> to vector<16x1xf32>
    %cst_120 = arith.constant 3.200000e+01 : f32
    %229 = vector.broadcast %cst_120 : f32 to vector<16x1xf32>
    %230 = arith.divf %228, %229 : vector<16x1xf32>
    %231 = vector.broadcast %223 : vector<16x1xf32> to vector<16x32xf32>
    %232 = arith.subf %219, %231 : vector<16x32xf32>
    %cst_121 = arith.constant 9.99999974E-6 : f32
    %233 = vector.broadcast %cst_121 : f32 to vector<16x1xf32>
    %234 = arith.addf %230, %233 : vector<16x1xf32>
    %235 = math.rsqrt %234 : vector<16x1xf32>
    %236 = vector.broadcast %235 : vector<16x1xf32> to vector<16x32xf32>
    %237 = arith.mulf %232, %236 : vector<16x32xf32>
    %238 = vector.broadcast %135 : vector<1x32xf32> to vector<16x32xf32>
    %239 = arith.mulf %237, %238 : vector<16x32xf32>
    %240 = vector.broadcast %136 : vector<1x32xf32> to vector<16x32xf32>
    %241 = arith.addf %239, %240 : vector<16x32xf32>
    %242 = vector.shape_cast %241 : vector<16x32xf32> to vector<2x8x32xf32>
    %243 = vector.broadcast %2 : vector<2x8x1xf32> to vector<2x8x32xf32>
    %244 = arith.mulf %242, %243 : vector<2x8x32xf32>
    %245 = vector.shape_cast %244 : vector<2x8x32xf32> to vector<16x32xf32>
    %246 = arith.truncf %245 : vector<16x32xf32> to vector<16x32xbf16>
    %c0_122 = arith.constant 0 : index
    %c0_123 = arith.constant 0 : index
    %247 = vector.load %arg26[%c0_122, %c0_123] : memref<32x64xbf16, #tpu.memory_space<vmem>>, vector<32x64xbf16>
    %cst_124 = arith.constant dense<0.000000e+00> : vector<16x64xf32>
    %248 = tpu.matmul %246, %247, %cst_124 {dimension_numbers = #tpu.dot_dimension_numbers<[1], [0], [0], [1], [0, 0, 1, 1], [], []>} : vector<16x32xbf16>, vector<32x64xbf16>, vector<16x64xf32> -> vector<16x64xf32>
    %c0_125 = arith.constant 0 : index
    %c0_126 = arith.constant 0 : index
    %249 = vector.load %arg27[%c0_125, %c0_126] : memref<1x64xf32, #tpu.memory_space<vmem>>, vector<1x64xf32>
    %250 = vector.broadcast %249 : vector<1x64xf32> to vector<16x64xf32>
    %251 = arith.addf %248, %250 : vector<16x64xf32>
    %cst_127 = arith.constant 0.000000e+00 : f32
    %252 = vector.broadcast %cst_127 : f32 to vector<16x64xf32>
    %253 = arith.maximumf %251, %252 : vector<16x64xf32>
    %254 = arith.truncf %253 : vector<16x64xf32> to vector<16x64xbf16>
    %c0_128 = arith.constant 0 : index
    %c0_129 = arith.constant 0 : index
    %255 = vector.load %arg28[%c0_128, %c0_129] : memref<64x32xbf16, #tpu.memory_space<vmem>>, vector<64x32xbf16>
    %cst_130 = arith.constant dense<0.000000e+00> : vector<16x32xf32>
    %256 = tpu.matmul %254, %255, %cst_130 {dimension_numbers = #tpu.dot_dimension_numbers<[1], [0], [0], [1], [0, 0, 1, 1], [], []>} : vector<16x64xbf16>, vector<64x32xbf16>, vector<16x32xf32> -> vector<16x32xf32>
    %c0_131 = arith.constant 0 : index
    %c0_132 = arith.constant 0 : index
    %257 = vector.load %arg29[%c0_131, %c0_132] : memref<1x32xf32, #tpu.memory_space<vmem>>, vector<1x32xf32>
    %258 = vector.broadcast %257 : vector<1x32xf32> to vector<16x32xf32>
    %259 = arith.addf %256, %258 : vector<16x32xf32>
    %260 = arith.addf %259, %245 : vector<16x32xf32>
    %c0_133 = arith.constant 0 : index
    %c0_134 = arith.constant 0 : index
    %261 = vector.load %arg30[%c0_133, %c0_134] : memref<1x32xf32, #tpu.memory_space<vmem>>, vector<1x32xf32>
    %c0_135 = arith.constant 0 : index
    %c0_136 = arith.constant 0 : index
    %262 = vector.load %arg31[%c0_135, %c0_136] : memref<1x32xf32, #tpu.memory_space<vmem>>, vector<1x32xf32>
    %cst_137 = arith.constant dense<0.000000e+00> : vector<16xf32>
    %263 = vector.multi_reduction <add>, %260, %cst_137 [1] : vector<16x32xf32> to vector<16xf32>
    %264 = vector.shape_cast %263 : vector<16xf32> to vector<16x1xf32>
    %cst_138 = arith.constant 3.200000e+01 : f32
    %265 = vector.broadcast %cst_138 : f32 to vector<16x1xf32>
    %266 = arith.divf %264, %265 : vector<16x1xf32>
    %267 = vector.broadcast %266 : vector<16x1xf32> to vector<16x32xf32>
    %268 = arith.subf %260, %267 : vector<16x32xf32>
    %269 = arith.mulf %268, %268 : vector<16x32xf32>
    %cst_139 = arith.constant dense<0.000000e+00> : vector<16xf32>
    %270 = vector.multi_reduction <add>, %269, %cst_139 [1] : vector<16x32xf32> to vector<16xf32>
    %271 = vector.shape_cast %270 : vector<16xf32> to vector<16x1xf32>
    %cst_140 = arith.constant 3.200000e+01 : f32
    %272 = vector.broadcast %cst_140 : f32 to vector<16x1xf32>
    %273 = arith.divf %271, %272 : vector<16x1xf32>
    %274 = vector.broadcast %266 : vector<16x1xf32> to vector<16x32xf32>
    %275 = arith.subf %260, %274 : vector<16x32xf32>
    %cst_141 = arith.constant 9.99999974E-6 : f32
    %276 = vector.broadcast %cst_141 : f32 to vector<16x1xf32>
    %277 = arith.addf %273, %276 : vector<16x1xf32>
    %278 = math.rsqrt %277 : vector<16x1xf32>
    %279 = vector.broadcast %278 : vector<16x1xf32> to vector<16x32xf32>
    %280 = arith.mulf %275, %279 : vector<16x32xf32>
    %281 = vector.broadcast %261 : vector<1x32xf32> to vector<16x32xf32>
    %282 = arith.mulf %280, %281 : vector<16x32xf32>
    %283 = vector.broadcast %262 : vector<1x32xf32> to vector<16x32xf32>
    %284 = arith.addf %282, %283 : vector<16x32xf32>
    %285 = vector.shape_cast %284 : vector<16x32xf32> to vector<2x8x32xf32>
    %286 = vector.broadcast %2 : vector<2x8x1xf32> to vector<2x8x32xf32>
    %287 = arith.mulf %285, %286 : vector<2x8x32xf32>
    %c0_142 = arith.constant 0 : index
    %c0_143 = arith.constant 0 : index
    %c0_144 = arith.constant 0 : index
    %288 = vector.load %arg32[%c0_142, %c0_143, %c0_144] : memref<2x8x32xf32, #tpu.memory_space<vmem>>, vector<2x8x32xf32>
    tpu.vector_store %arg32[%c0_142, %c0_143, %c0_144], %287 {strides = array<i32>} : memref<2x8x32xf32, #tpu.memory_space<vmem>>, vector<2x8x32xf32>,
    return
  }
  func.func @transform_0(%arg0: i32) -> (i32, i32, i32) {
    %c0_i32 = arith.constant 0 : i32
    %c0_i32_0 = arith.constant 0 : i32
    %c0_i32_1 = arith.constant 0 : i32
    return %arg0, %c0_i32, %c0_i32_0 : i32, i32, i32
  }
  func.func @transform_1(%arg0: i32) -> (i32, i32, i32) {
    %c0_i32 = arith.constant 0 : i32
    %c0_i32_0 = arith.constant 0 : i32
    %c0_i32_1 = arith.constant 0 : i32
    return %arg0, %c0_i32, %c0_i32_0 : i32, i32, i32
  }
  func.func @transform_2(%arg0: i32) -> (i32, i32, i32) {
    %c0_i32 = arith.constant 0 : i32
    %c0_i32_0 = arith.constant 0 : i32
    %c0_i32_1 = arith.constant 0 : i32
    return %arg0, %c0_i32, %c0_i32_0 : i32, i32, i32
  }
  func.func @transform_3(%arg0: i32) -> (i32, i32, i32) {
    %c0_i32 = arith.constant 0 : i32
    %c0_i32_0 = arith.constant 0 : i32
    %c0_i32_1 = arith.constant 0 : i32
    return %arg0, %c0_i32, %c0_i32_0 : i32, i32, i32
  }
  func.func @transform_4(%arg0: i32) -> (i32, i32, i32) {
    %c0_i32 = arith.constant 0 : i32
    %c0_i32_0 = arith.constant 0 : i32
    %c0_i32_1 = arith.constant 0 : i32
    return %arg0, %c0_i32, %c0_i32_0 : i32, i32, i32
  }
  func.func @transform_5(%arg0: i32) -> (i32, i32) {
    %c0_i32 = arith.constant 0 : i32
    %c0_i32_0 = arith.constant 0 : i32
    %c0_i32_1 = arith.constant 0 : i32
    return %c0_i32, %c0_i32_0 : i32, i32
  }
  func.func @transform_6(%arg0: i32) -> (i32, i32) {
    %c0_i32 = arith.constant 0 : i32
    %c0_i32_0 = arith.constant 0 : i32
    %c0_i32_1 = arith.constant 0 : i32
    return %c0_i32, %c0_i32_0 : i32, i32
  }
  func.func @transform_7(%arg0: i32) -> (i32, i32) {
    %c0_i32 = arith.constant 0 : i32
    %c0_i32_0 = arith.constant 0 : i32
    %c0_i32_1 = arith.constant 0 : i32
    return %c0_i32, %c0_i32_0 : i32, i32
  }
  func.func @transform_8(%arg0: i32) -> (i32, i32) {
    %c0_i32 = arith.constant 0 : i32
    %c0_i32_0 = arith.constant 0 : i32
    %c0_i32_1 = arith.constant 0 : i32
    return %c0_i32, %c0_i32_0 : i32, i32
  }
  func.func @transform_9(%arg0: i32) -> (i32, i32) {
    %c0_i32 = arith.constant 0 : i32
    %c0_i32_0 = arith.constant 0 : i32
    %c0_i32_1 = arith.constant 0 : i32
    return %c0_i32, %c0_i32_0 : i32, i32
  }
  func.func @transform_10(%arg0: i32) -> (i32, i32) {
    %c0_i32 = arith.constant 0 : i32
    %c0_i32_0 = arith.constant 0 : i32
    %c0_i32_1 = arith.constant 0 : i32
    return %c0_i32, %c0_i32_0 : i32, i32
  }
  func.func @transform_11(%arg0: i32) -> (i32, i32) {
    %c0_i32 = arith.constant 0 : i32
    %c0_i32_0 = arith.constant 0 : i32
    %c0_i32_1 = arith.constant 0 : i32
    return %c0_i32, %c0_i32_0 : i32, i32
  }
  func.func @transform_12(%arg0: i32) -> (i32, i32) {
    %c0_i32 = arith.constant 0 : i32
    %c0_i32_0 = arith.constant 0 : i32
    %c0_i32_1 = arith.constant 0 : i32
    return %c0_i32, %c0_i32_0 : i32, i32
  }
  func.func @transform_13(%arg0: i32) -> (i32, i32) {
    %c0_i32 = arith.constant 0 : i32
    %c0_i32_0 = arith.constant 0 : i32
    %c0_i32_1 = arith.constant 0 : i32
    return %c0_i32, %c0_i32_0 : i32, i32
  }
  func.func @transform_14(%arg0: i32) -> (i32, i32) {
    %c0_i32 = arith.constant 0 : i32
    %c0_i32_0 = arith.constant 0 : i32
    %c0_i32_1 = arith.constant 0 : i32
    return %c0_i32, %c0_i32_0 : i32, i32
  }
  func.func @transform_15(%arg0: i32) -> (i32, i32) {
    %c0_i32 = arith.constant 0 : i32
    %c0_i32_0 = arith.constant 0 : i32
    %c0_i32_1 = arith.constant 0 : i32
    return %c0_i32, %c0_i32_0 : i32, i32
  }
  func.func @transform_16(%arg0: i32) -> (i32, i32) {
    %c0_i32 = arith.constant 0 : i32
    %c0_i32_0 = arith.constant 0 : i32
    %c0_i32_1 = arith.constant 0 : i32
    return %c0_i32, %c0_i32_0 : i32, i32
  }
  func.func @transform_17(%arg0: i32) -> (i32, i32) {
    %c0_i32 = arith.constant 0 : i32
    %c0_i32_0 = arith.constant 0 : i32
    %c0_i32_1 = arith.constant 0 : i32
    return %c0_i32, %c0_i32_0 : i32, i32
  }
  func.func @transform_18(%arg0: i32) -> (i32, i32) {
    %c0_i32 = arith.constant 0 : i32
    %c0_i32_0 = arith.constant 0 : i32
    %c0_i32_1 = arith.constant 0 : i32
    return %c0_i32, %c0_i32_0 : i32, i32
  }
  func.func @transform_19(%arg0: i32) -> (i32, i32) {
    %c0_i32 = arith.constant 0 : i32
    %c0_i32_0 = arith.constant 0 : i32
    %c0_i32_1 = arith.constant 0 : i32
    return %c0_i32, %c0_i32_0 : i32, i32
  }
  func.func @transform_20(%arg0: i32) -> (i32, i32) {
    %c0_i32 = arith.constant 0 : i32
    %c0_i32_0 = arith.constant 0 : i32
    %c0_i32_1 = arith.constant 0 : i32
    return %c0_i32, %c0_i32_0 : i32, i32
  }
  func.func @transform_21(%arg0: i32) -> (i32, i32) {
    %c0_i32 = arith.constant 0 : i32
    %c0_i32_0 = arith.constant 0 : i32
    %c0_i32_1 = arith.constant 0 : i32
    return %c0_i32, %c0_i32_0 : i32, i32
  }
  func.func @transform_22(%arg0: i32) -> (i32, i32) {
    %c0_i32 = arith.constant 0 : i32
    %c0_i32_0 = arith.constant 0 : i32
    %c0_i32_1 = arith.constant 0 : i32
    return %c0_i32, %c0_i32_0 : i32, i32
  }
  func.func @transform_23(%arg0: i32) -> (i32, i32) {
    %c0_i32 = arith.constant 0 : i32
    %c0_i32_0 = arith.constant 0 : i32
    %c0_i32_1 = arith.constant 0 : i32
    return %c0_i32, %c0_i32_0 : i32, i32
  }
  func.func @transform_24(%arg0: i32) -> (i32, i32) {
    %c0_i32 = arith.constant 0 : i32
    %c0_i32_0 = arith.constant 0 : i32
    %c0_i32_1 = arith.constant 0 : i32
    return %c0_i32, %c0_i32_0 : i32, i32
  }
  func.func @transform_25(%arg0: i32) -> (i32, i32) {
    %c0_i32 = arith.constant 0 : i32
    %c0_i32_0 = arith.constant 0 : i32
    %c0_i32_1 = arith.constant 0 : i32
    return %c0_i32, %c0_i32_0 : i32, i32
  }
  func.func @transform_26(%arg0: i32) -> (i32, i32) {
    %c0_i32 = arith.constant 0 : i32
    %c0_i32_0 = arith.constant 0 : i32
    %c0_i32_1 = arith.constant 0 : i32
    return %c0_i32, %c0_i32_0 : i32, i32
  }
  func.func @transform_27(%arg0: i32) -> (i32, i32) {
    %c0_i32 = arith.constant 0 : i32
    %c0_i32_0 = arith.constant 0 : i32
    %c0_i32_1 = arith.constant 0 : i32
    return %c0_i32, %c0_i32_0 : i32, i32
  }
  func.func @transform_28(%arg0: i32) -> (i32, i32) {
    %c0_i32 = arith.constant 0 : i32
    %c0_i32_0 = arith.constant 0 : i32
    %c0_i32_1 = arith.constant 0 : i32
    return %c0_i32, %c0_i32_0 : i32, i32
  }
  func.func @transform_29(%arg0: i32) -> (i32, i32) {
    %c0_i32 = arith.constant 0 : i32
    %c0_i32_0 = arith.constant 0 : i32
    %c0_i32_1 = arith.constant 0 : i32
    return %c0_i32, %c0_i32_0 : i32, i32
  }
  func.func @transform_30(%arg0: i32) -> (i32, i32) {
    %c0_i32 = arith.constant 0 : i32
    %c0_i32_0 = arith.constant 0 : i32
    %c0_i32_1 = arith.constant 0 : i32
    return %c0_i32, %c0_i32_0 : i32, i32
  }
  func.func @transform_31(%arg0: i32) -> (i32, i32, i32) {
    %c0_i32 = arith.constant 0 : i32
    %c0_i32_0 = arith.constant 0 : i32
    %c0_i32_1 = arith.constant 0 : i32
    return %arg0, %c0_i32, %c0_i32_0 : i32, i32, i32
  }
  func.func @transform_32(%arg0: i32) -> (i32, i32, i32, i32) {
    %c0_i32 = arith.constant 0 : i32
    %c0_i32_0 = arith.constant 0 : i32
    %c0_i32_1 = arith.constant 0 : i32
    %c0_i32_2 = arith.constant 0 : i32
    return %c0_i32, %arg0, %c0_i32_0, %c0_i32_1 : i32, i32, i32, i32
  }
  func.func @transform_33(%arg0: i32) -> (i32, i32, i32, i32) {
    %c0_i32 = arith.constant 0 : i32
    %c0_i32_0 = arith.constant 0 : i32
    %c0_i32_1 = arith.constant 0 : i32
    %c0_i32_2 = arith.constant 0 : i32
    return %c0_i32, %arg0, %c0_i32_0, %c0_i32_1 : i32, i32, i32, i32
  }
}

</mosaic_0001>

<llo_original>
// kernel: tpu_custom_call.1
$region0: #{tpu_custom_call.1}
  #allocation0 [shape = 'u32[]', space=smem, size = 0x4, offset = 0x4, fixed_abs, tag = 'smem constant byte address 0x4 - core index']
  #allocation1 [shape = 'u32[72,128]{1,0:T(1,128)}', space=vmem, size = 0x9000, scoped, tag = 'internal scratch']
  #allocation2 [shape = 'f32[16,32]{1,0:T(8,128)}', space=vmem, size = 0x2000, scoped, tag = 'scratch operand']
  %s0 = inlined_call_operand.smem [shape: u32[34], index: -1, kind: input, shape index: {}]
  %s1 = sld [smem:[%s0]]
  %s2 = scalar_lea.smem %s0, 1
  %s3 = sld [smem:[%s2]]
  %s4 = scalar_lea.smem %s0, 2
  %s5 = sld [smem:[%s4]]
  %s6 = scalar_lea.smem %s0, 3
  %s7 = sld [smem:[%s6]]
  %s8 = scalar_lea.smem %s0, 4
  %s9 = sld [smem:[%s8]]
  %s10 = scalar_lea.smem %s0, 5
  %s11 = sld [smem:[%s10]]
  %s12 = scalar_lea.smem %s0, 6
  %s13 = sld [smem:[%s12]]
  %s14 = scalar_lea.smem %s0, 7
  %s15 = sld [smem:[%s14]]
  %s16 = scalar_lea.smem %s0, 8
  %s17 = sld [smem:[%s16]]
  %s18 = scalar_lea.smem %s0, 9
  %s19 = sld [smem:[%s18]]
  %s20 = scalar_lea.smem %s0, 10
  %s21 = sld [smem:[%s20]]
  %s22 = scalar_lea.smem %s0, 11
  %s23 = sld [smem:[%s22]]
  %s24 = scalar_lea.smem %s0, 12
  %s25 = sld [smem:[%s24]]
  %s26 = scalar_lea.smem %s0, 13
  %s27 = sld [smem:[%s26]]
  %s28 = scalar_lea.smem %s0, 14
  %s29 = sld [smem:[%s28]]
  %s30 = scalar_lea.smem %s0, 15
  %s31 = sld [smem:[%s30]]
  %s32 = scalar_lea.smem %s0, 16
  %s33 = sld [smem:[%s32]]
  %s34 = scalar_lea.smem %s0, 17
  %s35 = sld [smem:[%s34]]
  %s36 = scalar_lea.smem %s0, 18
  %s37 = sld [smem:[%s36]]
  %s38 = scalar_lea.smem %s0, 19
  %s39 = sld [smem:[%s38]]
  %s40 = scalar_lea.smem %s0, 20
  %s41 = sld [smem:[%s40]]
  %s42 = scalar_lea.smem %s0, 21
  %s43 = sld [smem:[%s42]]
  %s44 = scalar_lea.smem %s0, 22
  %s45 = sld [smem:[%s44]]
  %s46 = scalar_lea.smem %s0, 23
  %s47 = sld [smem:[%s46]]
  %s48 = scalar_lea.smem %s0, 24
  %s49 = sld [smem:[%s48]]
  %s50 = scalar_lea.smem %s0, 25
  %s51 = sld [smem:[%s50]]
  %s52 = scalar_lea.smem %s0, 26
  %s53 = sld [smem:[%s52]]
  %s54 = scalar_lea.smem %s0, 27
  %s55 = sld [smem:[%s54]]
  %s56 = scalar_lea.smem %s0, 28
  %s57 = sld [smem:[%s56]]
  %s58 = scalar_lea.smem %s0, 29
  %s59 = sld [smem:[%s58]]
  %s60 = scalar_lea.smem %s0, 30
  %s61 = sld [smem:[%s60]]
  %s62 = scalar_lea.smem %s0, 31
  %s63 = sld [smem:[%s62]]
  %s64 = scalar_lea.smem %s0, 32
  %s65 = sld [smem:[%s64]]
  %s66 = scalar_lea.smem %s0, 33
  %s67 = sld [smem:[%s66]]
  %68 = xla_tuple %s63, %s65, %s67
  %s69 = sld [smem:[#allocation0]]
  $region214: #{tpu_custom_call.1} parent=0
    _
  %s71 = ssub.s32 1, %s69
  %s72 = scalar_select 0, %s71, %s69
  $region1: #{tpu_custom_call.1} parent=0
    #allocation3 [shape = 'u8[2048]{0}', space=vmem, size = 0x800, scoped, tag = 'input window, operand 3, single buffered']
    #allocation4 [shape = 's32[1]{0}', space=sflag, size = 0x4, scoped, tag = 'scoped memory for tpu_custom_call.1']
    #allocation5 [shape = 's32[1]{0}', space=sflag, size = 0x4, scoped, tag = 'scoped memory for tpu_custom_call.1']
    #allocation6 [shape = 'u8[2048]{0}', space=vmem, size = 0x800, scoped, tag = 'input window, operand 4, single buffered']
    #allocation7 [shape = 's32[1]{0}', space=sflag, size = 0x4, scoped, tag = 'scoped memory for tpu_custom_call.1']
    #allocation8 [shape = 'u8[512]{0}', space=vmem, size = 0x400, scoped, tag = 'input window, operand 6, single buffered']
    #allocation9 [shape = 'u8[8192]{0}', space=vmem, size = 0x2000, scoped, tag = 'input window, operand 7, single buffered']
    #allocation10 [shape = 's32[1]{0}', space=sflag, size = 0x4, scoped, tag = 'scoped memory for tpu_custom_call.1']
    #allocation11 [shape = 'u8[512]{0}', space=vmem, size = 0x400, scoped, tag = 'input window, operand 8, single buffered']
    #allocation12 [shape = 'u8[8192]{0}', space=vmem, size = 0x2000, scoped, tag = 'input window, operand 9, single buffered']
    #allocation13 [shape = 's32[1]{0}', space=sflag, size = 0x4, scoped, tag = 'scoped memory for tpu_custom_call.1']
    #allocation14 [shape = 'u8[512]{0}', space=vmem, size = 0x400, scoped, tag = 'input window, operand 10, single buffered']
    #allocation15 [shape = 'u8[8192]{0}', space=vmem, size = 0x2000, scoped, tag = 'input window, operand 11, single buffered']
    #allocation16 [shape = 's32[1]{0}', space=sflag, size = 0x4, scoped, tag = 'scoped memory for tpu_custom_call.1']
    #allocation17 [shape = 'u8[512]{0}', space=vmem, size = 0x400, scoped, tag = 'input window, operand 12, single buffered']
    #allocation18 [shape = 'u8[512]{0}', space=vmem, size = 0x400, scoped, tag = 'input window, operand 13, single buffered']
    #allocation19 [shape = 's32[1]{0}', space=sflag, size = 0x4, scoped, tag = 'scoped memory for tpu_custom_call.1']
    #allocation20 [shape = 'u8[512]{0}', space=vmem, size = 0x400, scoped, tag = 'input window, operand 14, single buffered']
    #allocation21 [shape = 'u8[8192]{0}', space=vmem, size = 0x2000, scoped, tag = 'input window, operand 15, single buffered']
    #allocation22 [shape = 's32[1]{0}', space=sflag, size = 0x4, scoped, tag = 'scoped memory for tpu_custom_call.1']
    #allocation23 [shape = 'u8[8192]{0}', space=vmem, size = 0x2000, scoped, tag = 'input window, operand 17, single buffered']
    #allocation24 [shape = 'u8[8192]{0}', space=vmem, size = 0x2000, scoped, tag = 'input window, operand 19, single buffered']
    #allocation25 [shape = 's32[1]{0}', space=sflag, size = 0x4, scoped, tag = 'scoped memory for tpu_custom_call.1']
    #allocation26 [shape = 'u8[8192]{0}', space=vmem, size = 0x2000, scoped, tag = 'input window, operand 21, single buffered']
    #allocation27 [shape = 'u8[8192]{0}', space=vmem, size = 0x2000, scoped, tag = 'input window, operand 25, single buffered']
    #allocation28 [shape = 's32[1]{0}', space=sflag, size = 0x4, scoped, tag = 'scoped memory for tpu_custom_call.1']
    #allocation29 [shape = 'u8[8192]{0}', space=vmem, size = 0x2000, scoped, tag = 'output window, operand 0, single buffered']
    #allocation30 [shape = 'u8[8192]{0}', space=vmem, size = 0x2000, scoped, tag = 'output window, operand 1, single buffered']
    #allocation31 [shape = 's32[1]{0}', space=sflag, size = 0x4, scoped, tag = 'scoped memory for tpu_custom_call.1']
    #allocation32 [shape = 'u8[8192]{0}', space=vmem, size = 0x2000, scoped, tag = 'output window, operand 2, single buffered']
    %73 = vsyncpa [#allocation4], 0
    %74 = vsyncpa [#allocation7], 0
    %75 = vsyncpa [#allocation10], 0
    %76 = vsyncpa [#allocation13], 0
    %77 = vsyncpa [#allocation16], 0
    %78 = vsyncpa [#allocation19], 0
    %79 = vsyncpa [#allocation22], 0
    %80 = vsyncpa [#allocation25], 0
    %81 = vsyncpa [#allocation28], 0
    %82 = vsyncpa [#allocation5], 0
    %83 = vsyncpa [#allocation31], 0
    // Predicated region
    $region2: #{tpu_custom_call.1} parent=1 // pred_check
      _
    $region3: #{tpu_custom_call.1} parent=1 // pred_check_branch
      %85 = sbr.rel (0) target = $region5
    $region4: #{tpu_custom_call.1} parent=1 // pred_region
      _
    $region5: #{tpu_custom_call.1} parent=1 // pred_fallthru
      _
    // Predicated region
    $region6: #{tpu_custom_call.1} parent=1 // pred_check
      _
    $region7: #{tpu_custom_call.1} parent=1 // pred_check_branch
      %87 = sbr.rel (0) target = $region9
    $region8: #{tpu_custom_call.1} parent=1 // pred_region
      _
    $region9: #{tpu_custom_call.1} parent=1 // pred_fallthru
      _
    // Predicated region
    $region10: #{tpu_custom_call.1} parent=1 // pred_check
      _
    $region11: #{tpu_custom_call.1} parent=1 // pred_check_branch
      %89 = sbr.rel (0) target = $region13
    $region12: #{tpu_custom_call.1} parent=1 // pred_region
      _
    $region13: #{tpu_custom_call.1} parent=1 // pred_fallthru
      _
    // Predicated region
    $region14: #{tpu_custom_call.1} parent=1 // pred_check
      _
    $region15: #{tpu_custom_call.1} parent=1 // pred_check_branch
      %91 = sbr.rel (0) target = $region17
    $region16: #{tpu_custom_call.1} parent=1 // pred_region
      %93 = vsyncadd [#allocation4], 0
      %s94 = sshll.u32 %s7, 4
      %s95 = int_to_ptr.hbm [resolvable:$true] %s94
      %s96 = sshll.u32 [#allocation3], 4
      %s97 = int_to_ptr.vmem [resolvable:$true] %s96
      %102 = dma.hbm_to_vmem [thread:$0]  %s95, 64, %s97, [#allocation4], 32, 32, 2
    $region17: #{tpu_custom_call.1} parent=1 // pred_fallthru
      _
    // Predicated region
    $region18: #{tpu_custom_call.1} parent=1 // pred_check
      _
    $region19: #{tpu_custom_call.1} parent=1 // pred_check_branch
      %104 = sbr.rel (0) target = $region21
    $region20: #{tpu_custom_call.1} parent=1 // pred_region
      %106 = vsyncadd [#allocation7], 0
      %s107 = sshll.u32 %s9, 4
      %s108 = int_to_ptr.hbm [resolvable:$true] %s107
      %s109 = sshll.u32 [#allocation6], 4
      %s110 = int_to_ptr.vmem [resolvable:$true] %s109
      %115 = dma.hbm_to_vmem [thread:$0]  %s108, 64, %s110, [#allocation7], 32, 32, 2
    $region21: #{tpu_custom_call.1} parent=1 // pred_fallthru
      _
    // Predicated region
    $region22: #{tpu_custom_call.1} parent=1 // pred_check
      _
    $region23: #{tpu_custom_call.1} parent=1 // pred_check_branch
      %117 = sbr.rel (0) target = $region25
    $region24: #{tpu_custom_call.1} parent=1 // pred_region
      _
    $region25: #{tpu_custom_call.1} parent=1 // pred_fallthru
      _
    // Predicated region
    $region26: #{tpu_custom_call.1} parent=1 // pred_check
      _
    $region27: #{tpu_custom_call.1} parent=1 // pred_check_branch
      %119 = sbr.rel (0) target = $region29
    $region28: #{tpu_custom_call.1} parent=1 // pred_region
      %121 = vsyncadd [#allocation7], 0
      %s123 = sshll.u32 %s13, 4
      %s124 = int_to_ptr.hbm [resolvable:$true] %s123
      %s125 = sshll.u32 [#allocation8], 4
      %s126 = int_to_ptr.vmem [resolvable:$true] %s125
      %128 = dma.hbm_to_vmem [thread:$0]  %s124, 16, %s126, [#allocation7]
    $region29: #{tpu_custom_call.1} parent=1 // pred_fallthru
      _
    // Predicated region
    $region30: #{tpu_custom_call.1} parent=1 // pred_check
      _
    $region31: #{tpu_custom_call.1} parent=1 // pred_check_branch
      %130 = sbr.rel (0) target = $region33
    $region32: #{tpu_custom_call.1} parent=1 // pred_region
      %132 = vsyncadd [#allocation10], 0
      %s133 = sshll.u32 %s15, 4
      %s134 = int_to_ptr.hbm [resolvable:$true] %s133
      %s135 = sshll.u32 [#allocation9], 4
      %s136 = int_to_ptr.vmem [resolvable:$true] %s135
      %141 = dma.hbm_to_vmem [thread:$0]  %s134, 256, %s136, [#allocation10], 64, 64, 4
    $region33: #{tpu_custom_call.1} parent=1 // pred_fallthru
      _
    // Predicated region
    $region34: #{tpu_custom_call.1} parent=1 // pred_check
      _
    $region35: #{tpu_custom_call.1} parent=1 // pred_check_branch
      %143 = sbr.rel (0) target = $region37
    $region36: #{tpu_custom_call.1} parent=1 // pred_region
      %145 = vsyncadd [#allocation10], 0
      %s147 = sshll.u32 %s17, 4
      %s148 = int_to_ptr.hbm [resolvable:$true] %s147
      %s149 = sshll.u32 [#allocation11], 4
      %s150 = int_to_ptr.vmem [resolvable:$true] %s149
      %152 = dma.hbm_to_vmem [thread:$0]  %s148, 16, %s150, [#allocation10]
    $region37: #{tpu_custom_call.1} parent=1 // pred_fallthru
      _
    // Predicated region
    $region38: #{tpu_custom_call.1} parent=1 // pred_check
      _
    $region39: #{tpu_custom_call.1} parent=1 // pred_check_branch
      %154 = sbr.rel (0) target = $region41
    $region40: #{tpu_custom_call.1} parent=1 // pred_region
      %156 = vsyncadd [#allocation13], 0
      %s157 = sshll.u32 %s19, 4
      %s158 = int_to_ptr.hbm [resolvable:$true] %s157
      %s159 = sshll.u32 [#allocation12], 4
      %s160 = int_to_ptr.vmem [resolvable:$true] %s159
      %165 = dma.hbm_to_vmem [thread:$0]  %s158, 256, %s160, [#allocation13], 64, 64, 4
    $region41: #{tpu_custom_call.1} parent=1 // pred_fallthru
      _
    // Predicated region
    $region42: #{tpu_custom_call.1} parent=1 // pred_check
      _
    $region43: #{tpu_custom_call.1} parent=1 // pred_check_branch
      %167 = sbr.rel (0) target = $region45
    $region44: #{tpu_custom_call.1} parent=1 // pred_region
      %169 = vsyncadd [#allocation13], 0
      %s171 = sshll.u32 %s21, 4
      %s172 = int_to_ptr.hbm [resolvable:$true] %s171
      %s173 = sshll.u32 [#allocation14], 4
      %s174 = int_to_ptr.vmem [resolvable:$true] %s173
      %176 = dma.hbm_to_vmem [thread:$0]  %s172, 16, %s174, [#allocation13]
    $region45: #{tpu_custom_call.1} parent=1 // pred_fallthru
      _
    // Predicated region
    $region46: #{tpu_custom_call.1} parent=1 // pred_check
      _
    $region47: #{tpu_custom_call.1} parent=1 // pred_check_branch
      %178 = sbr.rel (0) target = $region49
    $region48: #{tpu_custom_call.1} parent=1 // pred_region
      %180 = vsyncadd [#allocation16], 0
      %s181 = sshll.u32 %s23, 4
      %s182 = int_to_ptr.hbm [resolvable:$true] %s181
      %s183 = sshll.u32 [#allocation15], 4
      %s184 = int_to_ptr.vmem [resolvable:$true] %s183
      %189 = dma.hbm_to_vmem [thread:$0]  %s182, 256, %s184, [#allocation16], 64, 64, 4
    $region49: #{tpu_custom_call.1} parent=1 // pred_fallthru
      _
    // Predicated region
    $region50: #{tpu_custom_call.1} parent=1 // pred_check
      _
    $region51: #{tpu_custom_call.1} parent=1 // pred_check_branch
      %191 = sbr.rel (0) target = $region53
    $region52: #{tpu_custom_call.1} parent=1 // pred_region
      %193 = vsyncadd [#allocation16], 0
      %s195 = sshll.u32 %s25, 4
      %s196 = int_to_ptr.hbm [resolvable:$true] %s195
      %s197 = sshll.u32 [#allocation17], 4
      %s198 = int_to_ptr.vmem [resolvable:$true] %s197
      %200 = dma.hbm_to_vmem [thread:$0]  %s196, 16, %s198, [#allocation16]
    $region53: #{tpu_custom_call.1} parent=1 // pred_fallthru
      _
    // Predicated region
    $region54: #{tpu_custom_call.1} parent=1 // pred_check
      _
    $region55: #{tpu_custom_call.1} parent=1 // pred_check_branch
      %202 = sbr.rel (0) target = $region57
    $region56: #{tpu_custom_call.1} parent=1 // pred_region
      %204 = vsyncadd [#allocation19], 0
      %s206 = sshll.u32 %s27, 4
      %s207 = int_to_ptr.hbm [resolvable:$true] %s206
      %s208 = sshll.u32 [#allocation18], 4
      %s209 = int_to_ptr.vmem [resolvable:$true] %s208
      %211 = dma.hbm_to_vmem [thread:$0]  %s207, 16, %s209, [#allocation19]
    $region57: #{tpu_custom_call.1} parent=1 // pred_fallthru
      _
    // Predicated region
    $region58: #{tpu_custom_call.1} parent=1 // pred_check
      _
    $region59: #{tpu_custom_call.1} parent=1 // pred_check_branch
      %213 = sbr.rel (0) target = $region61
    $region60: #{tpu_custom_call.1} parent=1 // pred_region
      %215 = vsyncadd [#allocation19], 0
      %s217 = sshll.u32 %s29, 4
      %s218 = int_to_ptr.hbm [resolvable:$true] %s217
      %s219 = sshll.u32 [#allocation20], 4
      %s220 = int_to_ptr.vmem [resolvable:$true] %s219
      %222 = dma.hbm_to_vmem [thread:$0]  %s218, 16, %s220, [#allocation19]
    $region61: #{tpu_custom_call.1} parent=1 // pred_fallthru
      _
    // Predicated region
    $region62: #{tpu_custom_call.1} parent=1 // pred_check
      _
    $region63: #{tpu_custom_call.1} parent=1 // pred_check_branch
      %224 = sbr.rel (0) target = $region65
    $region64: #{tpu_custom_call.1} parent=1 // pred_region
      %226 = vsyncadd [#allocation22], 0
      %s227 = sshll.u32 %s31, 4
      %s228 = int_to_ptr.hbm [resolvable:$true] %s227
      %s229 = sshll.u32 [#allocation21], 4
      %s230 = int_to_ptr.vmem [resolvable:$true] %s229
      %235 = dma.hbm_to_vmem [thread:$0]  %s228, 256, %s230, [#allocation22], 64, 64, 4
    $region65: #{tpu_custom_call.1} parent=1 // pred_fallthru
      _
    // Predicated region
    $region66: #{tpu_custom_call.1} parent=1 // pred_check
      _
    $region67: #{tpu_custom_call.1} parent=1 // pred_check_branch
      %237 = sbr.rel (0) target = $region69
    $region68: #{tpu_custom_call.1} parent=1 // pred_region
      _
    $region69: #{tpu_custom_call.1} parent=1 // pred_fallthru
      _
    // Predicated region
    $region70: #{tpu_custom_call.1} parent=1 // pred_check
      _
    $region71: #{tpu_custom_call.1} parent=1 // pred_check_branch
      %239 = sbr.rel (0) target = $region73
    $region72: #{tpu_custom_call.1} parent=1 // pred_region
      %241 = vsyncadd [#allocation22], 0
      %s242 = sshll.u32 %s35, 4
      %s243 = int_to_ptr.hbm [resolvable:$true] %s242
      %s244 = sshll.u32 [#allocation23], 4
      %s245 = int_to_ptr.vmem [resolvable:$true] %s244
      %250 = dma.hbm_to_vmem [thread:$0]  %s243, 256, %s245, [#allocation22], 64, 64, 4
    $region73: #{tpu_custom_call.1} parent=1 // pred_fallthru
      _
    // Predicated region
    $region74: #{tpu_custom_call.1} parent=1 // pred_check
      _
    $region75: #{tpu_custom_call.1} parent=1 // pred_check_branch
      %252 = sbr.rel (0) target = $region77
    $region76: #{tpu_custom_call.1} parent=1 // pred_region
      _
    $region77: #{tpu_custom_call.1} parent=1 // pred_fallthru
      _
    // Predicated region
    $region78: #{tpu_custom_call.1} parent=1 // pred_check
      _
    $region79: #{tpu_custom_call.1} parent=1 // pred_check_branch
      %254 = sbr.rel (0) target = $region81
    $region80: #{tpu_custom_call.1} parent=1 // pred_region
      %256 = vsyncadd [#allocation25], 0
      %s257 = sshll.u32 %s39, 4
      %s258 = int_to_ptr.hbm [resolvable:$true] %s257
      %s259 = sshll.u32 [#allocation24], 4
      %s260 = int_to_ptr.vmem [resolvable:$true] %s259
      %265 = dma.hbm_to_vmem [thread:$0]  %s258, 256, %s260, [#allocation25], 64, 64, 4
    $region81: #{tpu_custom_call.1} parent=1 // pred_fallthru
      _
    // Predicated region
    $region82: #{tpu_custom_call.1} parent=1 // pred_check
      _
    $region83: #{tpu_custom_call.1} parent=1 // pred_check_branch
      %267 = sbr.rel (0) target = $region85
    $region84: #{tpu_custom_call.1} parent=1 // pred_region
      _
    $region85: #{tpu_custom_call.1} parent=1 // pred_fallthru
      _
    // Predicated region
    $region86: #{tpu_custom_call.1} parent=1 // pred_check
      _
    $region87: #{tpu_custom_call.1} parent=1 // pred_check_branch
      %269 = sbr.rel (0) target = $region89
    $region88: #{tpu_custom_call.1} parent=1 // pred_region
      %271 = vsyncadd [#allocation25], 0
      %s272 = sshll.u32 %s43, 4
      %s273 = int_to_ptr.hbm [resolvable:$true] %s272
      %s274 = sshll.u32 [#allocation26], 4
      %s275 = int_to_ptr.vmem [resolvable:$true] %s274
      %280 = dma.hbm_to_vmem [thread:$0]  %s273, 256, %s275, [#allocation25], 64, 64, 4
    $region89: #{tpu_custom_call.1} parent=1 // pred_fallthru
      _
    // Predicated region
    $region90: #{tpu_custom_call.1} parent=1 // pred_check
      _
    $region91: #{tpu_custom_call.1} parent=1 // pred_check_branch
      %282 = sbr.rel (0) target = $region93
    $region92: #{tpu_custom_call.1} parent=1 // pred_region
      _
    $region93: #{tpu_custom_call.1} parent=1 // pred_fallthru
      _
    // Predicated region
    $region94: #{tpu_custom_call.1} parent=1 // pred_check
      _
    $region95: #{tpu_custom_call.1} parent=1 // pred_check_branch
      %284 = sbr.rel (0) target = $region97
    $region96: #{tpu_custom_call.1} parent=1 // pred_region
      _
    $region97: #{tpu_custom_call.1} parent=1 // pred_fallthru
      _
    // Predicated region
    $region98: #{tpu_custom_call.1} parent=1 // pred_check
      _
    $region99: #{tpu_custom_call.1} parent=1 // pred_check_branch
      %286 = sbr.rel (0) target = $region101
    $region100: #{tpu_custom_call.1} parent=1 // pred_region
      _
    $region101: #{tpu_custom_call.1} parent=1 // pred_fallthru
      _
    // Predicated region
    $region102: #{tpu_custom_call.1} parent=1 // pred_check
      _
    $region103: #{tpu_custom_call.1} parent=1 // pred_check_branch
      %288 = sbr.rel (0) target = $region105
    $region104: #{tpu_custom_call.1} parent=1 // pred_region
      %290 = vsyncadd [#allocation28], 0
      %s291 = sshll.u32 %s51, 4
      %s292 = int_to_ptr.hbm [resolvable:$true] %s291
      %s293 = sshll.u32 [#allocation27], 4
      %s294 = int_to_ptr.vmem [resolvable:$true] %s293
      %299 = dma.hbm_to_vmem [thread:$0]  %s292, 256, %s294, [#allocation28], 64, 64, 4
    $region105: #{tpu_custom_call.1} parent=1 // pred_fallthru
      _
    // Predicated region
    $region106: #{tpu_custom_call.1} parent=1 // pred_check
      _
    $region107: #{tpu_custom_call.1} parent=1 // pred_check_branch
      %301 = sbr.rel (0) target = $region109
    $region108: #{tpu_custom_call.1} parent=1 // pred_region
      _
    $region109: #{tpu_custom_call.1} parent=1 // pred_fallthru
      _
    // Predicated region
    $region110: #{tpu_custom_call.1} parent=1 // pred_check
      _
    $region111: #{tpu_custom_call.1} parent=1 // pred_check_branch
      %303 = sbr.rel (0) target = $region113
    $region112: #{tpu_custom_call.1} parent=1 // pred_region
      _
    $region113: #{tpu_custom_call.1} parent=1 // pred_fallthru
      _
    // Predicated region
    $region114: #{tpu_custom_call.1} parent=1 // pred_check
      _
    $region115: #{tpu_custom_call.1} parent=1 // pred_check_branch
      %305 = sbr.rel (0) target = $region117
    $region116: #{tpu_custom_call.1} parent=1 // pred_region
      _
    $region117: #{tpu_custom_call.1} parent=1 // pred_fallthru
      _
    // Predicated region
    $region118: #{tpu_custom_call.1} parent=1 // pred_check
      _
    $region119: #{tpu_custom_call.1} parent=1 // pred_check_branch
      %307 = sbr.rel (0) target = $region121
    $region120: #{tpu_custom_call.1} parent=1 // pred_region
      _
    $region121: #{tpu_custom_call.1} parent=1 // pred_fallthru
      _
    // Predicated region
    $region122: #{tpu_custom_call.1} parent=1 // pred_check
      _
    $region123: #{tpu_custom_call.1} parent=1 // pred_check_branch
      %309 = sbr.rel (0) target = $region125
    $region124: #{tpu_custom_call.1} parent=1 // pred_region
      _
    $region125: #{tpu_custom_call.1} parent=1 // pred_fallthru
      _
    // Predicated region
    $region126: #{tpu_custom_call.1} parent=1 // pred_check
      _
    $region127: #{tpu_custom_call.1} parent=1 // pred_check_branch
      %311 = sbr.rel (0) target = $region129
    $region128: #{tpu_custom_call.1} parent=1 // pred_region
      %313 = dma.done [#allocation4], 64
    $region129: #{tpu_custom_call.1} parent=1 // pred_fallthru
      _
    // Predicated region
    $region130: #{tpu_custom_call.1} parent=1 // pred_check
      _
    $region131: #{tpu_custom_call.1} parent=1 // pred_check_branch
      %315 = sbr.rel (0) target = $region133
    $region132: #{tpu_custom_call.1} parent=1 // pred_region
      %317 = dma.done [#allocation7], 64
    $region133: #{tpu_custom_call.1} parent=1 // pred_fallthru
      _
    // Predicated region
    $region134: #{tpu_custom_call.1} parent=1 // pred_check
      _
    $region135: #{tpu_custom_call.1} parent=1 // pred_check_branch
      %319 = sbr.rel (0) target = $region137
    $region136: #{tpu_custom_call.1} parent=1 // pred_region
      %321 = dma.done [#allocation7], 16
    $region137: #{tpu_custom_call.1} parent=1 // pred_fallthru
      _
    // Predicated region
    $region138: #{tpu_custom_call.1} parent=1 // pred_check
      _
    $region139: #{tpu_custom_call.1} parent=1 // pred_check_branch
      %323 = sbr.rel (0) target = $region141
    $region140: #{tpu_custom_call.1} parent=1 // pred_region
      %325 = dma.done [#allocation10], 256
    $region141: #{tpu_custom_call.1} parent=1 // pred_fallthru
      _
    // Predicated region
    $region142: #{tpu_custom_call.1} parent=1 // pred_check
      _
    $region143: #{tpu_custom_call.1} parent=1 // pred_check_branch
      %327 = sbr.rel (0) target = $region145
    $region144: #{tpu_custom_call.1} parent=1 // pred_region
      %329 = dma.done [#allocation10], 16
    $region145: #{tpu_custom_call.1} parent=1 // pred_fallthru
      _
    // Predicated region
    $region146: #{tpu_custom_call.1} parent=1 // pred_check
      _
    $region147: #{tpu_custom_call.1} parent=1 // pred_check_branch
      %331 = sbr.rel (0) target = $region149
    $region148: #{tpu_custom_call.1} parent=1 // pred_region
      %333 = dma.done [#allocation13], 256
    $region149: #{tpu_custom_call.1} parent=1 // pred_fallthru
      _
    // Predicated region
    $region150: #{tpu_custom_call.1} parent=1 // pred_check
      _
    $region151: #{tpu_custom_call.1} parent=1 // pred_check_branch
      %335 = sbr.rel (0) target = $region153
    $region152: #{tpu_custom_call.1} parent=1 // pred_region
      %337 = dma.done [#allocation13], 16
    $region153: #{tpu_custom_call.1} parent=1 // pred_fallthru
      _
    // Predicated region
    $region154: #{tpu_custom_call.1} parent=1 // pred_check
      _
    $region155: #{tpu_custom_call.1} parent=1 // pred_check_branch
      %339 = sbr.rel (0) target = $region157
    $region156: #{tpu_custom_call.1} parent=1 // pred_region
      %341 = dma.done [#allocation16], 256
    $region157: #{tpu_custom_call.1} parent=1 // pred_fallthru
      _
    // Predicated region
    $region158: #{tpu_custom_call.1} parent=1 // pred_check
      _
    $region159: #{tpu_custom_call.1} parent=1 // pred_check_branch
      %343 = sbr.rel (0) target = $region161
    $region160: #{tpu_custom_call.1} parent=1 // pred_region
      %345 = dma.done [#allocation16], 16
    $region161: #{tpu_custom_call.1} parent=1 // pred_fallthru
      _
    // Predicated region
    $region162: #{tpu_custom_call.1} parent=1 // pred_check
      _
    $region163: #{tpu_custom_call.1} parent=1 // pred_check_branch
      %347 = sbr.rel (0) target = $region165
    $region164: #{tpu_custom_call.1} parent=1 // pred_region
      %349 = dma.done [#allocation19], 16
    $region165: #{tpu_custom_call.1} parent=1 // pred_fallthru
      _
    // Predicated region
    $region166: #{tpu_custom_call.1} parent=1 // pred_check
      _
    $region167: #{tpu_custom_call.1} parent=1 // pred_check_branch
      %351 = sbr.rel (0) target = $region169
    $region168: #{tpu_custom_call.1} parent=1 // pred_region
      %353 = dma.done [#allocation19], 16
    $region169: #{tpu_custom_call.1} parent=1 // pred_fallthru
      _
    // Predicated region
    $region170: #{tpu_custom_call.1} parent=1 // pred_check
      _
    $region171: #{tpu_custom_call.1} parent=1 // pred_check_branch
      %355 = sbr.rel (0) target = $region173
    $region172: #{tpu_custom_call.1} parent=1 // pred_region
      %357 = dma.done [#allocation22], 256
    $region173: #{tpu_custom_call.1} parent=1 // pred_fallthru
      _
    // Predicated region
    $region174: #{tpu_custom_call.1} parent=1 // pred_check
      _
    $region175: #{tpu_custom_call.1} parent=1 // pred_check_branch
      %359 = sbr.rel (0) target = $region177
    $region176: #{tpu_custom_call.1} parent=1 // pred_region
      %361 = dma.done [#allocation22], 256
    $region177: #{tpu_custom_call.1} parent=1 // pred_fallthru
      _
    // Predicated region
    $region178: #{tpu_custom_call.1} parent=1 // pred_check
      _
    $region179: #{tpu_custom_call.1} parent=1 // pred_check_branch
      %363 = sbr.rel (0) target = $region181
    $region180: #{tpu_custom_call.1} parent=1 // pred_region
      %365 = dma.done [#allocation25], 256
    $region181: #{tpu_custom_call.1} parent=1 // pred_fallthru
      _
    // Predicated region
    $region182: #{tpu_custom_call.1} parent=1 // pred_check
      _
    $region183: #{tpu_custom_call.1} parent=1 // pred_check_branch
      %367 = sbr.rel (0) target = $region185
    $region184: #{tpu_custom_call.1} parent=1 // pred_region
      %369 = dma.done [#allocation25], 256
    $region185: #{tpu_custom_call.1} parent=1 // pred_fallthru
      _
    // Predicated region
    $region186: #{tpu_custom_call.1} parent=1 // pred_check
      _
    $region187: #{tpu_custom_call.1} parent=1 // pred_check_branch
      %371 = sbr.rel (0) target = $region189
    $region188: #{tpu_custom_call.1} parent=1 // pred_region
      %373 = dma.done [#allocation28], 256
    $region189: #{tpu_custom_call.1} parent=1 // pred_fallthru
      _
    %v377 = vld [vmem:[%s1] sm:$0xff]
    %v378 = vld [vmem:[%s1 + $0x8] sm:$0xff]
    %v379 = vld [vmem:[%s3] sm:$0xff]
    %v380 = vld [vmem:[%s3 + $0x8] sm:$0xff]
    %v381 = vld [vmem:[%s3 + $0x10] sm:$0xff]
    %v382 = vld [vmem:[%s3 + $0x18] sm:$0xff]
    %v383 = vld [vmem:[%s5] sm:$0xff]
    %v384 = vld [vmem:[%s5 + $0x8] sm:$0xff]
    %v385 = vld [vmem:[#allocation3] sm:$0x3]
    %v386 = vld [vmem:[#allocation3 + $0x2] sm:$0x3]
    %vm387 = vnez %v385
    %vm388 = vnez %v386
    %v389 = vld [vmem:[#allocation6] sm:$0x3]
    %v390 = vld [vmem:[#allocation6 + $0x2] sm:$0x3]
    %vm391 = vnez %v389
    %vm392 = vnez %v390
    %v393 = vld [vmem:[%s11] sm:$0xf]
    %v394 = vld [vmem:[%s11 + $0x4] sm:$0xf]
    %v395 = vld [vmem:[%s11 + $0x8] sm:$0xf]
    %v396 = vld [vmem:[%s11 + $0xc] sm:$0xf]
    %v397 = vld [vmem:[#allocation8] sm:$0x1]
    %v398 = vld [vmem:[#allocation9] sm:$0xf]
    %v399 = vld [vmem:[#allocation9 + $0x4] sm:$0xf]
    %v400 = vld [vmem:[#allocation9 + $0x8] sm:$0xf]
    %v401 = vld [vmem:[#allocation9 + $0xc] sm:$0xf]
    %v402 = vld [vmem:[#allocation11] sm:$0x1]
    %v403 = vld [vmem:[#allocation12] sm:$0xf]
    %v404 = vld [vmem:[#allocation12 + $0x4] sm:$0xf]
    %v405 = vld [vmem:[#allocation12 + $0x8] sm:$0xf]
    %v406 = vld [vmem:[#allocation12 + $0xc] sm:$0xf]
    %v407 = vld [vmem:[#allocation14] sm:$0x1]
    %v408 = vld [vmem:[#allocation15] sm:$0xf]
    %v409 = vld [vmem:[#allocation15 + $0x4] sm:$0xf]
    %v410 = vld [vmem:[#allocation15 + $0x8] sm:$0xf]
    %v411 = vld [vmem:[#allocation15 + $0xc] sm:$0xf]
    %v412 = vld [vmem:[#allocation17] sm:$0x1]
    %v413 = vld [vmem:[#allocation18] sm:$0x1]
    %v414 = vld [vmem:[#allocation20] sm:$0x1]
    %v415 = vpack.c.bf16 %v378, %v377
    %v417 = vperm.slane %v397, 0
    %v423 = vunpack.c.l.b16 %v393
    %v424 = vunpack.c.l.b16 %v394
    %v425 = vunpack.c.l.b16 %v395
    %v426 = vunpack.c.l.b16 %v396
    %v427 = vpack.c.b16 %v424, %v423
    %v428 = vpack.c.b16 %v426, %v425
    %vm431 = vcmask 261120
    %v433 = vsel %vm431, %v415, 0
    %435 = vmatpush.bf16.msra.mxu0 0
    %436 = vmatpush.bf16.msra.mxu0 0
    %437 = vmatpush.bf16.msra.mxu0 0
    %438 = vmatpush.bf16.msra.mxu0 0
    %439 = vmatpush.bf16.msra.mxu0 0
    %440 = vmatpush.bf16.msra.mxu0 0
    %441 = vmatpush.bf16.msra.mxu0 %v428
    %442 = vmatpush.bf16.msra.mxu0 %v427
    %443 = vmatmul.bf16.gmra.mxu0 %v433
    %v444 = vpop.f32.mrf.mxu0
    %v445 = vadd.f32 %v417, %v444
    %v446 = vpop.f32.mrf.mxu0
    %v447 = vadd.f32 %v417, %v446
    %448 = vdwg.mxu0
    %v450 = vperm.slane %v402, 0
    %v456 = vunpack.c.l.b16 %v398
    %v457 = vunpack.c.l.b16 %v399
    %v458 = vunpack.c.l.b16 %v400
    %v459 = vunpack.c.l.b16 %v401
    %v460 = vpack.c.b16 %v457, %v456
    %v461 = vpack.c.b16 %v459, %v458
    %464 = vmatpush.bf16.msra.mxu0 0
    %465 = vmatpush.bf16.msra.mxu0 0
    %466 = vmatpush.bf16.msra.mxu0 0
    %467 = vmatpush.bf16.msra.mxu0 0
    %468 = vmatpush.bf16.msra.mxu0 0
    %469 = vmatpush.bf16.msra.mxu0 0
    %470 = vmatpush.bf16.msra.mxu0 %v461
    %471 = vmatpush.bf16.msra.mxu0 %v460
    %472 = vmatmul.bf16.gmra.mxu0 %v433
    %v473 = vpop.f32.mrf.mxu0
    %v474 = vadd.f32 %v450, %v473
    %v475 = vpop.f32.mrf.mxu0
    %v476 = vadd.f32 %v450, %v475
    %477 = vdwg.mxu0
    %v479 = vperm.slane %v407, 0
    %v485 = vunpack.c.l.b16 %v403
    %v486 = vunpack.c.l.b16 %v404
    %v487 = vunpack.c.l.b16 %v405
    %v488 = vunpack.c.l.b16 %v406
    %v489 = vpack.c.b16 %v486, %v485
    %v490 = vpack.c.b16 %v488, %v487
    %493 = vmatpush.bf16.msra.mxu0 0
    %494 = vmatpush.bf16.msra.mxu0 0
    %495 = vmatpush.bf16.msra.mxu0 0
    %496 = vmatpush.bf16.msra.mxu0 0
    %497 = vmatpush.bf16.msra.mxu0 0
    %498 = vmatpush.bf16.msra.mxu0 0
    %499 = vmatpush.bf16.msra.mxu0 %v490
    %500 = vmatpush.bf16.msra.mxu0 %v489
    %501 = vmatmul.bf16.gmra.mxu0 %v433
    %v502 = vpop.f32.mrf.mxu0
    %v503 = vadd.f32 %v479, %v502
    %v504 = vpop.f32.mrf.mxu0
    %v505 = vadd.f32 %v479, %v504
    %506 = vdwg.mxu0
    %v507 = vpack.c.bf16 %v445, %v445
    %v508 = vpack.c.bf16 %v447, %v447
    %v509 = vpack.c.bf16 %v474, %v474
    %v510 = vpack.c.bf16 %v476, %v476
    %v511 = vpack.c.bf16 %v503, %v503
    %v512 = vpack.c.bf16 %v505, %v505
    %vm513 = vcmask 130048
    %v515 = vsel %vm513, %v507, 0
    %v518 = vsel %vm513, %v509, 0
    %520 = vmatpush.bf16.xpose.msra.mxu0 0
    %521 = vmatpush.bf16.xpose.msra.mxu0 0
    %522 = vmatpush.bf16.xpose.msra.mxu0 0
    %523 = vmatpush.bf16.xpose.msra.mxu0 0
    %524 = vmatpush.bf16.xpose.msra.mxu0 0
    %525 = vmatpush.bf16.xpose.msra.mxu0 0
    %526 = vmatpush.bf16.xpose.msra.mxu0 0
    %527 = vmatpush.bf16.xpose.msra.mxu0 %v518
    %528 = vmatmul.bf16.gmra.mxu0 %v515
    %v529 = vpop.f32.mrf.mxu0
    %v530 = vadd.f32 0.0, %v529
    %v531 = vpop.f32.mrf.mxu0
    %532 = vdwg.mxu0
    %v534 = vsel %vm513, %v508, 0
    %v537 = vsel %vm513, %v510, 0
    %539 = vmatpush.bf16.xpose.msra.mxu0 0
    %540 = vmatpush.bf16.xpose.msra.mxu0 0
    %541 = vmatpush.bf16.xpose.msra.mxu0 0
    %542 = vmatpush.bf16.xpose.msra.mxu0 0
    %543 = vmatpush.bf16.xpose.msra.mxu0 0
    %544 = vmatpush.bf16.xpose.msra.mxu0 0
    %545 = vmatpush.bf16.xpose.msra.mxu0 0
    %546 = vmatpush.bf16.xpose.msra.mxu0 %v537
    %547 = vmatmul.bf16.gmra.mxu0 %v534
    %v548 = vpop.f32.mrf.mxu0
    %v549 = vadd.f32 0.0, %v548
    %v550 = vpop.f32.mrf.mxu0
    %551 = vdwg.mxu0
    %v552 = vmul.f32 %v530, 0.25
    %v553 = vmul.f32 %v549, 0.25
    %v554 = vsel %vm387, 16843009, 0
    %v555 = vsel %vm388, 16843009, 0
    %v556 = vunpack.c.0.s8 %v554
    %v557 = vunpack.c.0.s8 %v555
    %vm558 = vcmp.ne.s32.totalorder %v556, 0
    %vm559 = vcmp.ne.s32.totalorder %v557, 0
    %v560 = vsel %vm558, -1e+09, %v552
    %v561 = vsel %vm559, -1e+09, %v553
    %vm562 = vcmask 64512
    %v563 = vsel %vm562, %v560, -inf
    %564 = vmax.xlane.f32.xlu0 %v563
    %v565 = vpop.xlane.xlu0 %564
    %v566 = vsel %vm562, %v561, -inf
    %567 = vmax.xlane.f32.xlu0 %v566
    %v568 = vpop.xlane.xlu0 %567
    %v569 = vsub.f32 %v560, %v565
    %v570 = vsub.f32 %v561, %v568
    %v571 = vmul.f32 %v569, 1.442695
    %v572 = vpow.pop %v571
    %v573 = vmul.f32 %v570, 1.442695
    %v574 = vpow.pop %v573
    %v575 = vsel %vm562, %v572, 0.0
    %576 = vadd.xlane.f32.xlu0 %v575
    %v577 = vpop.xlane.xlu0 %576
    %v578 = vsel %vm562, %v574, 0.0
    %579 = vadd.xlane.f32.xlu0 %v578
    %v580 = vpop.xlane.xlu0 %579
    %v581 = vrcp.pop %v577
    %v582 = vmul.f32 %v577, %v581
    %v583 = vsub.f32 1.0, %v582
    %v584 = vmul.f32 %v581, %v583
    %v585 = vadd.f32 %v581, %v584
    %vm586 = vweird.f32 %v577
    %vm587 = vweird.f32 %v581
    %vm588 = vmor %vm586, %vm587
    %v589 = vsel %vm588, %v581, %v585
    %v590 = vand.u32 2147483647, %v577
    %vm591 = vcmp.eq.f32.partialorder %v590, 8.507059e+37
    %v592 = vand.u32 %v577, 2147483648
    %v593 = vor.u32 1.1754944e-38, %v592
    %v594 = vsel %vm591, %v593, %v589
    %v595 = vmul.f32 %v572, %v594
    %v596 = vrcp.pop %v580
    %v597 = vmul.f32 %v580, %v596
    %v598 = vsub.f32 1.0, %v597
    %v599 = vmul.f32 %v596, %v598
    %v600 = vadd.f32 %v596, %v599
    %vm601 = vweird.f32 %v580
    %vm602 = vweird.f32 %v596
    %vm603 = vmor %vm601, %vm602
    %v604 = vsel %vm603, %v596, %v600
    %v605 = vand.u32 2147483647, %v580
    %vm606 = vcmp.eq.f32.partialorder %v605, 8.507059e+37
    %v607 = vand.u32 %v580, 2147483648
    %v608 = vor.u32 1.1754944e-38, %v607
    %v609 = vsel %vm606, %v608, %v604
    %v610 = vmul.f32 %v574, %v609
    %v611 = vpack.c.bf16 %v595, %v595
    %v612 = vpack.c.bf16 %v610, %v610
    %vm613 = vcmask 60416
    %614 = vst.msk [vmem:[#allocation30] sm:$0xf] %vm613, %v611
    %615 = vst.msk [vmem:[#allocation30 + $0x4] sm:$0xf] %vm613, %v612
    %v617 = vsel %vm562, %v611, 0
    %vm619 = vcmask 1043456
    %v621 = vsel %vm619, %v511, 0
    %623 = vmatpush.bf16.msra.mxu0 0
    %624 = vmatpush.bf16.msra.mxu0 0
    %625 = vmatpush.bf16.msra.mxu0 0
    %626 = vmatpush.bf16.msra.mxu0 0
    %627 = vmatpush.bf16.msra.mxu0 0
    %628 = vmatpush.bf16.msra.mxu0 0
    %629 = vmatpush.bf16.msra.mxu0 0
    %630 = vmatpush.bf16.msra.mxu0 %v621
    %631 = vmatmul.bf16.gmra.mxu0 %v617
    %v632 = vpop.f32.mrf.mxu0
    %v633 = vadd.f32 0.0, %v632
    %v634 = vpop.f32.mrf.mxu0
    %635 = vdwg.mxu0
    %v637 = vsel %vm562, %v612, 0
    %v640 = vsel %vm619, %v512, 0
    %642 = vmatpush.bf16.msra.mxu0 0
    %643 = vmatpush.bf16.msra.mxu0 0
    %644 = vmatpush.bf16.msra.mxu0 0
    %645 = vmatpush.bf16.msra.mxu0 0
    %646 = vmatpush.bf16.msra.mxu0 0
    %647 = vmatpush.bf16.msra.mxu0 0
    %648 = vmatpush.bf16.msra.mxu0 0
    %649 = vmatpush.bf16.msra.mxu0 %v640
    %650 = vmatmul.bf16.gmra.mxu0 %v637
    %v651 = vpop.f32.mrf.mxu0
    %v652 = vadd.f32 0.0, %v651
    %v653 = vpop.f32.mrf.mxu0
    %654 = vdwg.mxu0
    %655 = vst.msk [vmem:[#allocation2] sm:$0xff] %vm513, %v633
    %656 = vst.msk [vmem:[#allocation2 + $0x8] sm:$0xff] %vm513, %v652
    %v658 = vunpack.c.l.b16 %v507
    %v659 = vpack.c.b16 %v658, %v658
    %660 = vrot.lane.b32.xlu0 %v659, 112
    %v661 = vpop.permute.xlu0 %660
    %v663 = vunpack.c.l.b16 %v509
    %v664 = vpack.c.b16 %v663, %v663
    %665 = vrot.lane.b32.xlu0 %v664, 112
    %v666 = vpop.permute.xlu0 %665
    %v668 = vsel %vm513, %v661, 0
    %v671 = vsel %vm513, %v666, 0
    %673 = vmatpush.bf16.xpose.msra.mxu0 0
    %674 = vmatpush.bf16.xpose.msra.mxu0 0
    %675 = vmatpush.bf16.xpose.msra.mxu0 0
    %676 = vmatpush.bf16.xpose.msra.mxu0 0
    %677 = vmatpush.bf16.xpose.msra.mxu0 0
    %678 = vmatpush.bf16.xpose.msra.mxu0 0
    %679 = vmatpush.bf16.xpose.msra.mxu0 0
    %680 = vmatpush.bf16.xpose.msra.mxu0 %v671
    %681 = vmatmul.bf16.gmra.mxu0 %v668
    %v682 = vpop.f32.mrf.mxu0
    %v683 = vadd.f32 0.0, %v682
    %v684 = vpop.f32.mrf.mxu0
    %685 = vdwg.mxu0
    %v687 = vunpack.c.l.b16 %v508
    %v688 = vpack.c.b16 %v687, %v687
    %689 = vrot.lane.b32.xlu0 %v688, 112
    %v690 = vpop.permute.xlu0 %689
    %v692 = vunpack.c.l.b16 %v510
    %v693 = vpack.c.b16 %v692, %v692
    %694 = vrot.lane.b32.xlu0 %v693, 112
    %v695 = vpop.permute.xlu0 %694
    %v697 = vsel %vm513, %v690, 0
    %v700 = vsel %vm513, %v695, 0
    %702 = vmatpush.bf16.xpose.msra.mxu0 0
    %703 = vmatpush.bf16.xpose.msra.mxu0 0
    %704 = vmatpush.bf16.xpose.msra.mxu0 0
    %705 = vmatpush.bf16.xpose.msra.mxu0 0
    %706 = vmatpush.bf16.xpose.msra.mxu0 0
    %707 = vmatpush.bf16.xpose.msra.mxu0 0
    %708 = vmatpush.bf16.xpose.msra.mxu0 0
    %709 = vmatpush.bf16.xpose.msra.mxu0 %v700
    %710 = vmatmul.bf16.gmra.mxu0 %v697
    %v711 = vpop.f32.mrf.mxu0
    %v712 = vadd.f32 0.0, %v711
    %v713 = vpop.f32.mrf.mxu0
    %714 = vdwg.mxu0
    %v715 = vmul.f32 %v683, 0.25
    %v716 = vmul.f32 %v712, 0.25
    %v717 = vsel %vm558, -1e+09, %v715
    %v718 = vsel %vm559, -1e+09, %v716
    %v719 = vsel %vm562, %v717, -inf
    %720 = vmax.xlane.f32.xlu0 %v719
    %v721 = vpop.xlane.xlu0 %720
    %v722 = vsel %vm562, %v718, -inf
    %723 = vmax.xlane.f32.xlu0 %v722
    %v724 = vpop.xlane.xlu0 %723
    %v725 = vsub.f32 %v717, %v721
    %v726 = vsub.f32 %v718, %v724
    %v727 = vmul.f32 %v725, 1.442695
    %v728 = vpow.pop %v727
    %v729 = vmul.f32 %v726, 1.442695
    %v730 = vpow.pop %v729
    %v731 = vsel %vm562, %v728, 0.0
    %732 = vadd.xlane.f32.xlu0 %v731
    %v733 = vpop.xlane.xlu0 %732
    %v734 = vsel %vm562, %v730, 0.0
    %735 = vadd.xlane.f32.xlu0 %v734
    %v736 = vpop.xlane.xlu0 %735
    %v737 = vrcp.pop %v733
    %v738 = vmul.f32 %v733, %v737
    %v739 = vsub.f32 1.0, %v738
    %v740 = vmul.f32 %v737, %v739
    %v741 = vadd.f32 %v737, %v740
    %vm742 = vweird.f32 %v733
    %vm743 = vweird.f32 %v737
    %vm744 = vmor %vm742, %vm743
    %v745 = vsel %vm744, %v737, %v741
    %v746 = vand.u32 2147483647, %v733
    %vm747 = vcmp.eq.f32.partialorder %v746, 8.507059e+37
    %v748 = vand.u32 %v733, 2147483648
    %v749 = vor.u32 1.1754944e-38, %v748
    %v750 = vsel %vm747, %v749, %v745
    %v751 = vmul.f32 %v728, %v750
    %v752 = vrcp.pop %v736
    %v753 = vmul.f32 %v736, %v752
    %v754 = vsub.f32 1.0, %v753
    %v755 = vmul.f32 %v752, %v754
    %v756 = vadd.f32 %v752, %v755
    %vm757 = vweird.f32 %v736
    %vm758 = vweird.f32 %v752
    %vm759 = vmor %vm757, %vm758
    %v760 = vsel %vm759, %v752, %v756
    %v761 = vand.u32 2147483647, %v736
    %vm762 = vcmp.eq.f32.partialorder %v761, 8.507059e+37
    %v763 = vand.u32 %v736, 2147483648
    %v764 = vor.u32 1.1754944e-38, %v763
    %v765 = vsel %vm762, %v764, %v760
    %v766 = vmul.f32 %v730, %v765
    %v767 = vpack.c.bf16 %v751, %v751
    %v768 = vpack.c.bf16 %v766, %v766
    %s769 = scalar_lea.vmem [#allocation30], 8
    %770 = vst.msk [vmem:[%s769] sm:$0xf] %vm613, %v767
    %771 = vst.msk [vmem:[%s769 + $0x4] sm:$0xf] %vm613, %v768
    %v773 = vunpack.c.l.b16 %v511
    %v774 = vpack.c.b16 %v773, %v773
    %775 = vrot.lane.b32.xlu0 %v774, 112
    %v776 = vpop.permute.xlu0 %775
    %v778 = vsel %vm562, %v767, 0
    %v781 = vsel %vm619, %v776, 0
    %783 = vmatpush.bf16.msra.mxu0 0
    %784 = vmatpush.bf16.msra.mxu0 0
    %785 = vmatpush.bf16.msra.mxu0 0
    %786 = vmatpush.bf16.msra.mxu0 0
    %787 = vmatpush.bf16.msra.mxu0 0
    %788 = vmatpush.bf16.msra.mxu0 0
    %789 = vmatpush.bf16.msra.mxu0 0
    %790 = vmatpush.bf16.msra.mxu0 %v781
    %791 = vmatmul.bf16.gmra.mxu0 %v778
    %v792 = vpop.f32.mrf.mxu0
    %v793 = vadd.f32 0.0, %v792
    %v794 = vpop.f32.mrf.mxu0
    %795 = vdwg.mxu0
    %v797 = vunpack.c.l.b16 %v512
    %v798 = vpack.c.b16 %v797, %v797
    %799 = vrot.lane.b32.xlu0 %v798, 112
    %v800 = vpop.permute.xlu0 %799
    %v802 = vsel %vm562, %v768, 0
    %v805 = vsel %vm619, %v800, 0
    %807 = vmatpush.bf16.msra.mxu0 0
    %808 = vmatpush.bf16.msra.mxu0 0
    %809 = vmatpush.bf16.msra.mxu0 0
    %810 = vmatpush.bf16.msra.mxu0 0
    %811 = vmatpush.bf16.msra.mxu0 0
    %812 = vmatpush.bf16.msra.mxu0 0
    %813 = vmatpush.bf16.msra.mxu0 0
    %814 = vmatpush.bf16.msra.mxu0 %v805
    %815 = vmatmul.bf16.gmra.mxu0 %v802
    %v816 = vpop.f32.mrf.mxu0
    %v817 = vadd.f32 0.0, %v816
    %v818 = vpop.f32.mrf.mxu0
    %819 = vdwg.mxu0
    %822 = vrot.lane.b32.xlu0 %v793, 16
    %v823 = vpop.permute.xlu0 %822
    %824 = vrot.lane.b32.xlu0 %v817, 16
    %v825 = vpop.permute.xlu0 %824
    %vm828 = vcmask 261248
    %829 = vst.msk [vmem:[#allocation2] sm:$0xff] %vm828, %v823
    %830 = vst.msk [vmem:[#allocation2 + $0x8] sm:$0xff] %vm828, %v825
    %v831 = vld [vmem:[#allocation2] sm:$0xff]
    %v832 = vld [vmem:[#allocation2 + $0x8] sm:$0xff]
    %v833 = vpack.c.bf16 %v832, %v831
    %v835 = vperm.slane %v412, 0
    %v841 = vunpack.c.l.b16 %v408
    %v842 = vunpack.c.l.b16 %v409
    %v843 = vunpack.c.l.b16 %v410
    %v844 = vunpack.c.l.b16 %v411
    %v845 = vpack.c.b16 %v842, %v841
    %v846 = vpack.c.b16 %v844, %v843
    %v850 = vsel %vm431, %v833, 0
    %852 = vmatpush.bf16.msra.mxu0 0
    %853 = vmatpush.bf16.msra.mxu0 0
    %854 = vmatpush.bf16.msra.mxu0 0
    %855 = vmatpush.bf16.msra.mxu0 0
    %856 = vmatpush.bf16.msra.mxu0 0
    %857 = vmatpush.bf16.msra.mxu0 0
    %858 = vmatpush.bf16.msra.mxu0 %v846
    %859 = vmatpush.bf16.msra.mxu0 %v845
    %860 = vmatmul.bf16.gmra.mxu0 %v850
    %v861 = vpop.f32.mrf.mxu0
    %v862 = vadd.f32 %v835, %v861
    %v863 = vpop.f32.mrf.mxu0
    %v864 = vadd.f32 %v835, %v863
    %865 = vdwg.mxu0
    %v866 = vadd.f32 %v862, %v377
    %v867 = vadd.f32 %v864, %v378
    %v868 = vsel %vm431, %v866, 0.0
    %869 = vadd.xlane.f32.xlu0 %v868
    %v870 = vpop.xlane.xlu0 %869
    %v871 = vsel %vm431, %v867, 0.0
    %872 = vadd.xlane.f32.xlu0 %v871
    %v873 = vpop.xlane.xlu0 %872
    %v874 = vrcp.pop 32.0
    %v875 = vmul.f32 32.0, %v874
    %v876 = vsub.f32 1.0, %v875
    %v877 = vmul.f32 %v874, %v876
    %v878 = vadd.f32 %v874, %v877
    %vm879 = vweird.f32 %v874
    %v880 = vsel %vm879, %v874, %v878
    %v881 = vmul.f32 %v870, %v880
    %v882 = vmul.f32 %v873, %v880
    %v883 = vsub.f32 %v866, %v881
    %v884 = vsub.f32 %v867, %v882
    %v885 = vmul.f32 %v883, %v883
    %v886 = vmul.f32 %v884, %v884
    %v887 = vsel %vm431, %v885, 0.0
    %888 = vadd.xlane.f32.xlu0 %v887
    %v889 = vpop.xlane.xlu0 %888
    %v890 = vsel %vm431, %v886, 0.0
    %891 = vadd.xlane.f32.xlu0 %v890
    %v892 = vpop.xlane.xlu0 %891
    %v893 = vmul.f32 %v889, %v880
    %v894 = vmul.f32 %v892, %v880
    %v895 = vadd.f32 %v893, 1e-05
    %v896 = vadd.f32 %v894, 1e-05
    %v897 = vrsqrt.pop %v895
    %v898 = vmul.f32 %v897, %v895
    %v899 = vmul.f32 %v898, %v897
    %v900 = vmul.f32 0.5, %v899
    %v901 = vsub.f32 1.5, %v900
    %v902 = vmul.f32 %v897, %v901
    %vm903 = vweird.f32 %v895
    %vm904 = vweird.f32 %v897
    %vm905 = vmor %vm903, %vm904
    %v906 = vsel %vm905, %v897, %v902
    %v907 = vrsqrt.pop %v896
    %v908 = vmul.f32 %v907, %v896
    %v909 = vmul.f32 %v908, %v907
    %v910 = vmul.f32 0.5, %v909
    %v911 = vsub.f32 1.5, %v910
    %v912 = vmul.f32 %v907, %v911
    %vm913 = vweird.f32 %v896
    %vm914 = vweird.f32 %v907
    %vm915 = vmor %vm913, %vm914
    %v916 = vsel %vm915, %v907, %v912
    %v917 = vmul.f32 %v883, %v906
    %v918 = vmul.f32 %v884, %v916
    %v920 = vperm.slane %v413, 0
    %v922 = vmul.f32 %v917, %v920
    %v923 = vmul.f32 %v918, %v920
    %v925 = vperm.slane %v414, 0
    %v927 = vadd.f32 %v922, %v925
    %v928 = vadd.f32 %v923, %v925
    %930 = vset.pattern.permute.xlu0 0
    %931 = vperm.xlu0 %930, %v383
    %v932 = vpop.permute.xlu0 %931
    %935 = vset.pattern.permute.xlu0 0
    %936 = vperm.xlu0 %935, %v384
    %v937 = vpop.permute.xlu0 %936
    %v939 = vmul.f32 %v927, %v932
    %v940 = vmul.f32 %v928, %v937
    %v941 = vld [vmem:[#allocation21] sm:$0xf]
    %v942 = vld [vmem:[#allocation21 + $0x4] sm:$0xf]
    %v943 = vld [vmem:[#allocation21 + $0x8] sm:$0xf]
    %v944 = vld [vmem:[#allocation21 + $0xc] sm:$0xf]
    %v945 = vld [vmem:[%s33] sm:$0x1]
    %v946 = vld [vmem:[#allocation23] sm:$0xf]
    %v947 = vld [vmem:[#allocation23 + $0x4] sm:$0xf]
    %v948 = vld [vmem:[#allocation23 + $0x8] sm:$0xf]
    %v949 = vld [vmem:[#allocation23 + $0xc] sm:$0xf]
    %v950 = vld [vmem:[%s37] sm:$0x1]
    %v951 = vld [vmem:[#allocation24] sm:$0xf]
    %v952 = vld [vmem:[#allocation24 + $0x4] sm:$0xf]
    %v953 = vld [vmem:[#allocation24 + $0x8] sm:$0xf]
    %v954 = vld [vmem:[#allocation24 + $0xc] sm:$0xf]
    %v955 = vld [vmem:[%s41] sm:$0x1]
    %v956 = vld [vmem:[#allocation26] sm:$0xf]
    %v957 = vld [vmem:[#allocation26 + $0x4] sm:$0xf]
    %v958 = vld [vmem:[#allocation26 + $0x8] sm:$0xf]
    %v959 = vld [vmem:[#allocation26 + $0xc] sm:$0xf]
    %v960 = vld [vmem:[%s45] sm:$0x1]
    %v961 = vld [vmem:[%s47] sm:$0x1]
    %v962 = vld [vmem:[%s49] sm:$0x1]
    %v963 = vpack.c.bf16 %v940, %v939
    %v964 = vpack.c.bf16 %v380, %v379
    %v965 = vpack.c.bf16 %v382, %v381
    %v967 = vperm.slane %v945, 0
    %v973 = vunpack.c.l.b16 %v941
    %v974 = vunpack.c.l.b16 %v942
    %v975 = vunpack.c.l.b16 %v943
    %v976 = vunpack.c.l.b16 %v944
    %v977 = vpack.c.b16 %v974, %v973
    %v978 = vpack.c.b16 %v976, %v975
    %v982 = vsel %vm431, %v963, 0
    %984 = vmatpush.bf16.msra.mxu0 0
    %985 = vmatpush.bf16.msra.mxu0 0
    %986 = vmatpush.bf16.msra.mxu0 0
    %987 = vmatpush.bf16.msra.mxu0 0
    %988 = vmatpush.bf16.msra.mxu0 0
    %989 = vmatpush.bf16.msra.mxu0 0
    %990 = vmatpush.bf16.msra.mxu0 %v978
    %991 = vmatpush.bf16.msra.mxu0 %v977
    %992 = vmatmul.bf16.gmra.mxu0 %v982
    %v993 = vpop.f32.mrf.mxu0
    %v994 = vadd.f32 %v967, %v993
    %v995 = vpop.f32.mrf.mxu0
    %v996 = vadd.f32 %v967, %v995
    %997 = vdwg.mxu0
    %v999 = vperm.slane %v950, 0
    %v1005 = vunpack.c.l.b16 %v946
    %v1006 = vunpack.c.l.b16 %v947
    %v1007 = vunpack.c.l.b16 %v948
    %v1008 = vunpack.c.l.b16 %v949
    %v1009 = vpack.c.b16 %v1006, %v1005
    %v1010 = vpack.c.b16 %v1008, %v1007
    %v1014 = vsel %vm431, %v964, 0
    %v1017 = vsel %vm431, %v965, 0
    %1019 = vmatpush.bf16.msra.mxu0 0
    %1020 = vmatpush.bf16.msra.mxu0 0
    %1021 = vmatpush.bf16.msra.mxu0 0
    %1022 = vmatpush.bf16.msra.mxu0 0
    %1023 = vmatpush.bf16.msra.mxu0 0
    %1024 = vmatpush.bf16.msra.mxu0 0
    %1025 = vmatpush.bf16.msra.mxu0 %v1010
    %1026 = vmatpush.bf16.msra.mxu0 %v1009
    %1027 = vmatmul.bf16.gmra.mxu0 %v1014
    %v1028 = vpop.f32.mrf.mxu0
    %v1029 = vadd.f32 %v999, %v1028
    %v1030 = vpop.f32.mrf.mxu0
    %v1031 = vadd.f32 %v999, %v1030
    %1032 = vmatmul.bf16.gmra.mxu0 %v1017
    %v1033 = vpop.f32.mrf.mxu0
    %v1034 = vadd.f32 %v999, %v1033
    %v1035 = vpop.f32.mrf.mxu0
    %v1036 = vadd.f32 %v999, %v1035
    %1037 = vdwg.mxu0
    %v1039 = vperm.slane %v955, 0
    %v1045 = vunpack.c.l.b16 %v951
    %v1046 = vunpack.c.l.b16 %v952
    %v1047 = vunpack.c.l.b16 %v953
    %v1048 = vunpack.c.l.b16 %v954
    %v1049 = vpack.c.b16 %v1046, %v1045
    %v1050 = vpack.c.b16 %v1048, %v1047
    %1053 = vmatpush.bf16.msra.mxu0 0
    %1054 = vmatpush.bf16.msra.mxu0 0
    %1055 = vmatpush.bf16.msra.mxu0 0
    %1056 = vmatpush.bf16.msra.mxu0 0
    %1057 = vmatpush.bf16.msra.mxu0 0
    %1058 = vmatpush.bf16.msra.mxu0 0
    %1059 = vmatpush.bf16.msra.mxu0 %v1050
    %1060 = vmatpush.bf16.msra.mxu0 %v1049
    %1061 = vmatmul.bf16.gmra.mxu0 %v1014
    %v1062 = vpop.f32.mrf.mxu0
    %v1063 = vadd.f32 %v1039, %v1062
    %v1064 = vpop.f32.mrf.mxu0
    %v1065 = vadd.f32 %v1039, %v1064
    %1066 = vmatmul.bf16.gmra.mxu0 %v1017
    %v1067 = vpop.f32.mrf.mxu0
    %v1068 = vadd.f32 %v1039, %v1067
    %v1069 = vpop.f32.mrf.mxu0
    %v1070 = vadd.f32 %v1039, %v1069
    %1071 = vdwg.mxu0
    %v1072 = vpack.c.bf16 %v994, %v994
    %v1073 = vpack.c.bf16 %v996, %v996
    %v1074 = vpack.c.bf16 %v1029, %v1029
    %v1075 = vpack.c.bf16 %v1031, %v1031
    %v1076 = vpack.c.bf16 %v1034, %v1034
    %v1077 = vpack.c.bf16 %v1036, %v1036
    %v1078 = vpack.c.bf16 %v1063, %v1063
    %v1079 = vpack.c.bf16 %v1065, %v1065
    %v1080 = vpack.c.bf16 %v1068, %v1068
    %v1081 = vpack.c.bf16 %v1070, %v1070
    %v1084 = vunpack.c.l.b16 %v1074
    %v1085 = vunpack.c.l.b16 %v1075
    %v1086 = vpack.c.b16 %v1085, %v1084
    %v1088 = vsel %vm513, %v1072, 0
    %v1091 = vsel %vm513, %v1086, 0
    %1093 = vmatpush.bf16.xpose.msra.mxu0 0
    %1094 = vmatpush.bf16.xpose.msra.mxu0 0
    %1095 = vmatpush.bf16.xpose.msra.mxu0 0
    %1096 = vmatpush.bf16.xpose.msra.mxu0 0
    %1097 = vmatpush.bf16.xpose.msra.mxu0 0
    %1098 = vmatpush.bf16.xpose.msra.mxu0 0
    %1099 = vmatpush.bf16.xpose.msra.mxu0 0
    %1100 = vmatpush.bf16.xpose.msra.mxu0 %v1091
    %1101 = vmatmul.bf16.gmra.mxu0 %v1088
    %v1102 = vpop.f32.mrf.mxu0
    %v1103 = vadd.f32 0.0, %v1102
    %v1104 = vpop.f32.mrf.mxu0
    %1105 = vdwg.mxu0
    %v1108 = vunpack.c.l.b16 %v1076
    %v1109 = vunpack.c.l.b16 %v1077
    %v1110 = vpack.c.b16 %v1109, %v1108
    %v1112 = vsel %vm513, %v1073, 0
    %v1115 = vsel %vm513, %v1110, 0
    %1117 = vmatpush.bf16.xpose.msra.mxu0 0
    %1118 = vmatpush.bf16.xpose.msra.mxu0 0
    %1119 = vmatpush.bf16.xpose.msra.mxu0 0
    %1120 = vmatpush.bf16.xpose.msra.mxu0 0
    %1121 = vmatpush.bf16.xpose.msra.mxu0 0
    %1122 = vmatpush.bf16.xpose.msra.mxu0 0
    %1123 = vmatpush.bf16.xpose.msra.mxu0 0
    %1124 = vmatpush.bf16.xpose.msra.mxu0 %v1115
    %1125 = vmatmul.bf16.gmra.mxu0 %v1112
    %v1126 = vpop.f32.mrf.mxu0
    %v1127 = vadd.f32 0.0, %v1126
    %v1128 = vpop.f32.mrf.mxu0
    %1129 = vdwg.mxu0
    %v1130 = vmul.f32 %v1103, 0.25
    %v1131 = vmul.f32 %v1127, 0.25
    %v1132 = vsel %vm391, 16843009, 0
    %v1133 = vsel %vm392, 16843009, 0
    %v1134 = vunpack.c.0.s8 %v1132
    %v1135 = vunpack.c.0.s8 %v1133
    %vm1136 = vcmp.ne.s32.totalorder %v1134, 0
    %vm1137 = vcmp.ne.s32.totalorder %v1135, 0
    %v1138 = vsel %vm1136, -1e+09, %v1130
    %v1139 = vsel %vm1137, -1e+09, %v1131
    %v1140 = vsel %vm513, %v1138, -inf
    %1141 = vmax.xlane.f32.xlu0 %v1140
    %v1142 = vpop.xlane.xlu0 %1141
    %v1143 = vsel %vm513, %v1139, -inf
    %1144 = vmax.xlane.f32.xlu0 %v1143
    %v1145 = vpop.xlane.xlu0 %1144
    %v1146 = vsub.f32 %v1138, %v1142
    %v1147 = vsub.f32 %v1139, %v1145
    %v1148 = vmul.f32 %v1146, 1.442695
    %v1149 = vpow.pop %v1148
    %v1150 = vmul.f32 %v1147, 1.442695
    %v1151 = vpow.pop %v1150
    %v1152 = vsel %vm513, %v1149, 0.0
    %1153 = vadd.xlane.f32.xlu0 %v1152
    %v1154 = vpop.xlane.xlu0 %1153
    %v1155 = vsel %vm513, %v1151, 0.0
    %1156 = vadd.xlane.f32.xlu0 %v1155
    %v1157 = vpop.xlane.xlu0 %1156
    %v1158 = vrcp.pop %v1154
    %v1159 = vmul.f32 %v1154, %v1158
    %v1160 = vsub.f32 1.0, %v1159
    %v1161 = vmul.f32 %v1158, %v1160
    %v1162 = vadd.f32 %v1158, %v1161
    %vm1163 = vweird.f32 %v1154
    %vm1164 = vweird.f32 %v1158
    %vm1165 = vmor %vm1163, %vm1164
    %v1166 = vsel %vm1165, %v1158, %v1162
    %v1167 = vand.u32 2147483647, %v1154
    %vm1168 = vcmp.eq.f32.partialorder %v1167, 8.507059e+37
    %v1169 = vand.u32 %v1154, 2147483648
    %v1170 = vor.u32 1.1754944e-38, %v1169
    %v1171 = vsel %vm1168, %v1170, %v1166
    %v1172 = vmul.f32 %v1149, %v1171
    %v1173 = vrcp.pop %v1157
    %v1174 = vmul.f32 %v1157, %v1173
    %v1175 = vsub.f32 1.0, %v1174
    %v1176 = vmul.f32 %v1173, %v1175
    %v1177 = vadd.f32 %v1173, %v1176
    %vm1178 = vweird.f32 %v1157
    %vm1179 = vweird.f32 %v1173
    %vm1180 = vmor %vm1178, %vm1179
    %v1181 = vsel %vm1180, %v1173, %v1177
    %v1182 = vand.u32 2147483647, %v1157
    %vm1183 = vcmp.eq.f32.partialorder %v1182, 8.507059e+37
    %v1184 = vand.u32 %v1157, 2147483648
    %v1185 = vor.u32 1.1754944e-38, %v1184
    %v1186 = vsel %vm1183, %v1185, %v1181
    %v1187 = vmul.f32 %v1151, %v1186
    %v1188 = vpack.c.bf16 %v1172, %v1172
    %v1189 = vpack.c.bf16 %v1187, %v1187
    %vm1190 = vcmask 125952
    %1191 = vst.msk [vmem:[#allocation32] sm:$0xf] %vm1190, %v1188
    %1192 = vst.msk [vmem:[#allocation32 + $0x4] sm:$0xf] %vm1190, %v1189
    %v1195 = vunpack.c.l.b16 %v1078
    %v1196 = vunpack.c.l.b16 %v1079
    %v1197 = vpack.c.b16 %v1196, %v1195
    %v1200 = vsel %vm513, %v1188, 0
    %1202 = vmatpush.bf16.msra.mxu0 0
    %1203 = vmatpush.bf16.msra.mxu0 0
    %1204 = vmatpush.bf16.msra.mxu0 0
    %1205 = vmatpush.bf16.msra.mxu0 0
    %1206 = vmatpush.bf16.msra.mxu0 0
    %1207 = vmatpush.bf16.msra.mxu0 0
    %1208 = vmatpush.bf16.msra.mxu0 0
    %1209 = vmatpush.bf16.msra.mxu0 %v1197
    %1210 = vmatmul.bf16.gmra.mxu0 %v1200
    %v1211 = vpop.f32.mrf.mxu0
    %v1212 = vadd.f32 0.0, %v1211
    %v1213 = vpop.f32.mrf.mxu0
    %1214 = vdwg.mxu0
    %v1217 = vunpack.c.l.b16 %v1080
    %v1218 = vunpack.c.l.b16 %v1081
    %v1219 = vpack.c.b16 %v1218, %v1217
    %v1222 = vsel %vm513, %v1189, 0
    %1224 = vmatpush.bf16.msra.mxu0 0
    %1225 = vmatpush.bf16.msra.mxu0 0
    %1226 = vmatpush.bf16.msra.mxu0 0
    %1227 = vmatpush.bf16.msra.mxu0 0
    %1228 = vmatpush.bf16.msra.mxu0 0
    %1229 = vmatpush.bf16.msra.mxu0 0
    %1230 = vmatpush.bf16.msra.mxu0 0
    %1231 = vmatpush.bf16.msra.mxu0 %v1219
    %1232 = vmatmul.bf16.gmra.mxu0 %v1222
    %v1233 = vpop.f32.mrf.mxu0
    %v1234 = vadd.f32 0.0, %v1233
    %v1235 = vpop.f32.mrf.mxu0
    %1236 = vdwg.mxu0
    %1237 = vst.msk [vmem:[#allocation2] sm:$0xff] %vm513, %v1212
    %1238 = vst.msk [vmem:[#allocation2 + $0x8] sm:$0xff] %vm513, %v1234
    %v1240 = vunpack.c.l.b16 %v1072
    %v1241 = vpack.c.b16 %v1240, %v1240
    %1242 = vrot.lane.b32.xlu0 %v1241, 112
    %v1243 = vpop.permute.xlu0 %1242
    %1244 = vrot.lane.b32.xlu0 %v1086, 112
    %v1245 = vpop.permute.xlu0 %1244
    %v1247 = vsel %vm513, %v1243, 0
    %v1250 = vsel %vm513, %v1245, 0
    %1252 = vmatpush.bf16.xpose.msra.mxu0 0
    %1253 = vmatpush.bf16.xpose.msra.mxu0 0
    %1254 = vmatpush.bf16.xpose.msra.mxu0 0
    %1255 = vmatpush.bf16.xpose.msra.mxu0 0
    %1256 = vmatpush.bf16.xpose.msra.mxu0 0
    %1257 = vmatpush.bf16.xpose.msra.mxu0 0
    %1258 = vmatpush.bf16.xpose.msra.mxu0 0
    %1259 = vmatpush.bf16.xpose.msra.mxu0 %v1250
    %1260 = vmatmul.bf16.gmra.mxu0 %v1247
    %v1261 = vpop.f32.mrf.mxu0
    %v1262 = vadd.f32 0.0, %v1261
    %v1263 = vpop.f32.mrf.mxu0
    %1264 = vdwg.mxu0
    %v1266 = vunpack.c.l.b16 %v1073
    %v1267 = vpack.c.b16 %v1266, %v1266
    %1268 = vrot.lane.b32.xlu0 %v1267, 112
    %v1269 = vpop.permute.xlu0 %1268
    %1270 = vrot.lane.b32.xlu0 %v1110, 112
    %v1271 = vpop.permute.xlu0 %1270
    %v1273 = vsel %vm513, %v1269, 0
    %v1276 = vsel %vm513, %v1271, 0
    %1278 = vmatpush.bf16.xpose.msra.mxu0 0
    %1279 = vmatpush.bf16.xpose.msra.mxu0 0
    %1280 = vmatpush.bf16.xpose.msra.mxu0 0
    %1281 = vmatpush.bf16.xpose.msra.mxu0 0
    %1282 = vmatpush.bf16.xpose.msra.mxu0 0
    %1283 = vmatpush.bf16.xpose.msra.mxu0 0
    %1284 = vmatpush.bf16.xpose.msra.mxu0 0
    %1285 = vmatpush.bf16.xpose.msra.mxu0 %v1276
    %1286 = vmatmul.bf16.gmra.mxu0 %v1273
    %v1287 = vpop.f32.mrf.mxu0
    %v1288 = vadd.f32 0.0, %v1287
    %v1289 = vpop.f32.mrf.mxu0
    %1290 = vdwg.mxu0
    %v1291 = vmul.f32 %v1262, 0.25
    %v1292 = vmul.f32 %v1288, 0.25
    %v1293 = vsel %vm1136, -1e+09, %v1291
    %v1294 = vsel %vm1137, -1e+09, %v1292
    %v1295 = vsel %vm513, %v1293, -inf
    %1296 = vmax.xlane.f32.xlu0 %v1295
    %v1297 = vpop.xlane.xlu0 %1296
    %v1298 = vsel %vm513, %v1294, -inf
    %1299 = vmax.xlane.f32.xlu0 %v1298
    %v1300 = vpop.xlane.xlu0 %1299
    %v1301 = vsub.f32 %v1293, %v1297
    %v1302 = vsub.f32 %v1294, %v1300
    %v1303 = vmul.f32 %v1301, 1.442695
    %v1304 = vpow.pop %v1303
    %v1305 = vmul.f32 %v1302, 1.442695
    %v1306 = vpow.pop %v1305
    %v1307 = vsel %vm513, %v1304, 0.0
    %1308 = vadd.xlane.f32.xlu0 %v1307
    %v1309 = vpop.xlane.xlu0 %1308
    %v1310 = vsel %vm513, %v1306, 0.0
    %1311 = vadd.xlane.f32.xlu0 %v1310
    %v1312 = vpop.xlane.xlu0 %1311
    %v1313 = vrcp.pop %v1309
    %v1314 = vmul.f32 %v1309, %v1313
    %v1315 = vsub.f32 1.0, %v1314
    %v1316 = vmul.f32 %v1313, %v1315
    %v1317 = vadd.f32 %v1313, %v1316
    %vm1318 = vweird.f32 %v1309
    %vm1319 = vweird.f32 %v1313
    %vm1320 = vmor %vm1318, %vm1319
    %v1321 = vsel %vm1320, %v1313, %v1317
    %v1322 = vand.u32 2147483647, %v1309
    %vm1323 = vcmp.eq.f32.partialorder %v1322, 8.507059e+37
    %v1324 = vand.u32 %v1309, 2147483648
    %v1325 = vor.u32 1.1754944e-38, %v1324
    %v1326 = vsel %vm1323, %v1325, %v1321
    %v1327 = vmul.f32 %v1304, %v1326
    %v1328 = vrcp.pop %v1312
    %v1329 = vmul.f32 %v1312, %v1328
    %v1330 = vsub.f32 1.0, %v1329
    %v1331 = vmul.f32 %v1328, %v1330
    %v1332 = vadd.f32 %v1328, %v1331
    %vm1333 = vweird.f32 %v1312
    %vm1334 = vweird.f32 %v1328
    %vm1335 = vmor %vm1333, %vm1334
    %v1336 = vsel %vm1335, %v1328, %v1332
    %v1337 = vand.u32 2147483647, %v1312
    %vm1338 = vcmp.eq.f32.partialorder %v1337, 8.507059e+37
    %v1339 = vand.u32 %v1312, 2147483648
    %v1340 = vor.u32 1.1754944e-38, %v1339
    %v1341 = vsel %vm1338, %v1340, %v1336
    %v1342 = vmul.f32 %v1306, %v1341
    %v1343 = vpack.c.bf16 %v1327, %v1327
    %v1344 = vpack.c.bf16 %v1342, %v1342
    %s1345 = scalar_lea.vmem [#allocation32], 8
    %1346 = vst.msk [vmem:[%s1345] sm:$0xf] %vm1190, %v1343
    %1347 = vst.msk [vmem:[%s1345 + $0x4] sm:$0xf] %vm1190, %v1344
    %1348 = vrot.lane.b32.xlu0 %v1197, 112
    %v1349 = vpop.permute.xlu0 %1348
    %v1352 = vsel %vm513, %v1343, 0
    %1354 = vmatpush.bf16.msra.mxu0 0
    %1355 = vmatpush.bf16.msra.mxu0 0
    %1356 = vmatpush.bf16.msra.mxu0 0
    %1357 = vmatpush.bf16.msra.mxu0 0
    %1358 = vmatpush.bf16.msra.mxu0 0
    %1359 = vmatpush.bf16.msra.mxu0 0
    %1360 = vmatpush.bf16.msra.mxu0 0
    %1361 = vmatpush.bf16.msra.mxu0 %v1349
    %1362 = vmatmul.bf16.gmra.mxu0 %v1352
    %v1363 = vpop.f32.mrf.mxu0
    %v1364 = vadd.f32 0.0, %v1363
    %v1365 = vpop.f32.mrf.mxu0
    %1366 = vdwg.mxu0
    %1367 = vrot.lane.b32.xlu0 %v1219, 112
    %v1368 = vpop.permute.xlu0 %1367
    %v1371 = vsel %vm513, %v1344, 0
    %1373 = vmatpush.bf16.msra.mxu0 0
    %1374 = vmatpush.bf16.msra.mxu0 0
    %1375 = vmatpush.bf16.msra.mxu0 0
    %1376 = vmatpush.bf16.msra.mxu0 0
    %1377 = vmatpush.bf16.msra.mxu0 0
    %1378 = vmatpush.bf16.msra.mxu0 0
    %1379 = vmatpush.bf16.msra.mxu0 0
    %1380 = vmatpush.bf16.msra.mxu0 %v1368
    %1381 = vmatmul.bf16.gmra.mxu0 %v1371
    %v1382 = vpop.f32.mrf.mxu0
    %v1383 = vadd.f32 0.0, %v1382
    %v1384 = vpop.f32.mrf.mxu0
    %1385 = vdwg.mxu0
    %1388 = vrot.lane.b32.xlu0 %v1364, 16
    %v1389 = vpop.permute.xlu0 %1388
    %1390 = vrot.lane.b32.xlu0 %v1383, 16
    %v1391 = vpop.permute.xlu0 %1390
    %1394 = vst.msk [vmem:[#allocation2] sm:$0xff] %vm828, %v1389
    %1395 = vst.msk [vmem:[#allocation2 + $0x8] sm:$0xff] %vm828, %v1391
    %v1396 = vld [vmem:[#allocation2] sm:$0xff]
    %v1397 = vld [vmem:[#allocation2 + $0x8] sm:$0xff]
    %v1398 = vpack.c.bf16 %v1397, %v1396
    %v1400 = vperm.slane %v960, 0
    %v1406 = vunpack.c.l.b16 %v956
    %v1407 = vunpack.c.l.b16 %v957
    %v1408 = vunpack.c.l.b16 %v958
    %v1409 = vunpack.c.l.b16 %v959
    %v1410 = vpack.c.b16 %v1407, %v1406
    %v1411 = vpack.c.b16 %v1409, %v1408
    %v1415 = vsel %vm431, %v1398, 0
    %1417 = vmatpush.bf16.msra.mxu0 0
    %1418 = vmatpush.bf16.msra.mxu0 0
    %1419 = vmatpush.bf16.msra.mxu0 0
    %1420 = vmatpush.bf16.msra.mxu0 0
    %1421 = vmatpush.bf16.msra.mxu0 0
    %1422 = vmatpush.bf16.msra.mxu0 0
    %1423 = vmatpush.bf16.msra.mxu0 %v1411
    %1424 = vmatpush.bf16.msra.mxu0 %v1410
    %1425 = vmatmul.bf16.gmra.mxu0 %v1415
    %v1426 = vpop.f32.mrf.mxu0
    %v1427 = vadd.f32 %v1400, %v1426
    %v1428 = vpop.f32.mrf.mxu0
    %v1429 = vadd.f32 %v1400, %v1428
    %1430 = vdwg.mxu0
    %v1431 = vadd.f32 %v1427, %v939
    %v1432 = vadd.f32 %v1429, %v940
    %v1433 = vsel %vm431, %v1431, 0.0
    %1434 = vadd.xlane.f32.xlu0 %v1433
    %v1435 = vpop.xlane.xlu0 %1434
    %v1436 = vsel %vm431, %v1432, 0.0
    %1437 = vadd.xlane.f32.xlu0 %v1436
    %v1438 = vpop.xlane.xlu0 %1437
    %v1439 = vmul.f32 %v1435, %v880
    %v1440 = vmul.f32 %v1438, %v880
    %v1441 = vsub.f32 %v1431, %v1439
    %v1442 = vsub.f32 %v1432, %v1440
    %v1443 = vmul.f32 %v1441, %v1441
    %v1444 = vmul.f32 %v1442, %v1442
    %v1445 = vsel %vm431, %v1443, 0.0
    %1446 = vadd.xlane.f32.xlu0 %v1445
    %v1447 = vpop.xlane.xlu0 %1446
    %v1448 = vsel %vm431, %v1444, 0.0
    %1449 = vadd.xlane.f32.xlu0 %v1448
    %v1450 = vpop.xlane.xlu0 %1449
    %v1451 = vmul.f32 %v1447, %v880
    %v1452 = vmul.f32 %v1450, %v880
    %v1453 = vadd.f32 %v1451, 1e-05
    %v1454 = vadd.f32 %v1452, 1e-05
    %v1455 = vrsqrt.pop %v1453
    %v1456 = vmul.f32 %v1455, %v1453
    %v1457 = vmul.f32 %v1456, %v1455
    %v1458 = vmul.f32 0.5, %v1457
    %v1459 = vsub.f32 1.5, %v1458
    %v1460 = vmul.f32 %v1455, %v1459
    %vm1461 = vweird.f32 %v1453
    %vm1462 = vweird.f32 %v1455
    %vm1463 = vmor %vm1461, %vm1462
    %v1464 = vsel %vm1463, %v1455, %v1460
    %v1465 = vrsqrt.pop %v1454
    %v1466 = vmul.f32 %v1465, %v1454
    %v1467 = vmul.f32 %v1466, %v1465
    %v1468 = vmul.f32 0.5, %v1467
    %v1469 = vsub.f32 1.5, %v1468
    %v1470 = vmul.f32 %v1465, %v1469
    %vm1471 = vweird.f32 %v1454
    %vm1472 = vweird.f32 %v1465
    %vm1473 = vmor %vm1471, %vm1472
    %v1474 = vsel %vm1473, %v1465, %v1470
    %v1475 = vmul.f32 %v1441, %v1464
    %v1476 = vmul.f32 %v1442, %v1474
    %v1478 = vperm.slane %v961, 0
    %v1480 = vmul.f32 %v1475, %v1478
    %v1481 = vmul.f32 %v1476, %v1478
    %v1483 = vperm.slane %v962, 0
    %v1485 = vadd.f32 %v1480, %v1483
    %v1486 = vadd.f32 %v1481, %v1483
    %v1487 = vmul.f32 %v1485, %v932
    %v1488 = vmul.f32 %v1486, %v937
    %v1489 = vpack.c.bf16 %v1488, %v1487
    %v1490 = vld [vmem:[#allocation27] sm:$0xf]
    %v1491 = vld [vmem:[#allocation27 + $0x4] sm:$0xf]
    %v1492 = vld [vmem:[#allocation27 + $0x8] sm:$0xf]
    %v1493 = vld [vmem:[#allocation27 + $0xc] sm:$0xf]
    %v1494 = vld [vmem:[%s53] sm:$0x1]
    %v1496 = vperm.slane %v1494, 0
    %v1502 = vunpack.c.l.b16 %v1490
    %v1503 = vunpack.c.l.b16 %v1491
    %v1504 = vunpack.c.l.b16 %v1492
    %v1505 = vunpack.c.l.b16 %v1493
    %v1506 = vpack.c.b16 %v1503, %v1502
    %v1507 = vpack.c.b16 %v1505, %v1504
    %v1511 = vsel %vm431, %v1489, 0
    %1513 = vmatpush.bf16.msra.mxu0 0
    %1514 = vmatpush.bf16.msra.mxu0 0
    %1515 = vmatpush.bf16.msra.mxu0 0
    %1516 = vmatpush.bf16.msra.mxu0 0
    %1517 = vmatpush.bf16.msra.mxu0 0
    %1518 = vmatpush.bf16.msra.mxu0 0
    %1519 = vmatpush.bf16.msra.mxu0 %v1507
    %1520 = vmatpush.bf16.msra.mxu0 %v1506
    %1521 = vmatmul.bf16.gmra.mxu0 %v1511
    %v1522 = vpop.f32.mrf.mxu0
    %v1523 = vadd.f32 %v1496, %v1522
    %v1524 = vpop.f32.mrf.mxu0
    %v1525 = vadd.f32 %v1496, %v1524
    %1526 = vdwg.mxu0
    %v1527 = vmax.f32 %v1523, 0.0
    %v1528 = vmax.f32 %v1525, 0.0
    %v1529 = vpack.c.bf16 %v1528, %v1527
    %v1530 = vld [vmem:[%s55] sm:$0xf]
    %v1531 = vld [vmem:[%s55 + $0x4] sm:$0xf]
    %v1532 = vld [vmem:[%s55 + $0x8] sm:$0xf]
    %v1533 = vld [vmem:[%s55 + $0xc] sm:$0xf]
    %v1534 = vld [vmem:[%s55 + $0x10] sm:$0xf]
    %v1535 = vld [vmem:[%s55 + $0x14] sm:$0xf]
    %v1536 = vld [vmem:[%s55 + $0x18] sm:$0xf]
    %v1537 = vld [vmem:[%s55 + $0x1c] sm:$0xf]
    %v1538 = vld [vmem:[%s57] sm:$0x1]
    %v1540 = vperm.slane %v1538, 0
    %v1550 = vunpack.c.l.b16 %v1530
    %v1551 = vunpack.c.l.b16 %v1531
    %v1552 = vunpack.c.l.b16 %v1532
    %v1553 = vunpack.c.l.b16 %v1533
    %v1554 = vunpack.c.l.b16 %v1534
    %v1555 = vunpack.c.l.b16 %v1535
    %v1556 = vunpack.c.l.b16 %v1536
    %v1557 = vunpack.c.l.b16 %v1537
    %v1558 = vpack.c.b16 %v1551, %v1550
    %v1559 = vpack.c.b16 %v1553, %v1552
    %v1560 = vpack.c.b16 %v1555, %v1554
    %v1561 = vpack.c.b16 %v1557, %v1556
    %vm1566 = vcmask 523264
    %v1568 = vsel %vm1566, %v1529, 0
    %1570 = vmatpush.bf16.msra.mxu0 0
    %1571 = vmatpush.bf16.msra.mxu0 0
    %1572 = vmatpush.bf16.msra.mxu0 0
    %1573 = vmatpush.bf16.msra.mxu0 0
    %1574 = vmatpush.bf16.msra.mxu0 %v1561
    %1575 = vmatpush.bf16.msra.mxu0 %v1560
    %1576 = vmatpush.bf16.msra.mxu0 %v1559
    %1577 = vmatpush.bf16.msra.mxu0 %v1558
    %1578 = vmatmul.bf16.gmra.mxu0 %v1568
    %v1579 = vpop.f32.mrf.mxu0
    %v1580 = vadd.f32 %v1540, %v1579
    %v1581 = vpop.f32.mrf.mxu0
    %v1582 = vadd.f32 %v1540, %v1581
    %1583 = vdwg.mxu0
    %v1584 = vadd.f32 %v1580, %v1487
    %v1585 = vadd.f32 %v1582, %v1488
    %v1586 = vld [vmem:[%s59] sm:$0x1]
    %v1587 = vld [vmem:[%s61] sm:$0x1]
    %v1588 = vsel %vm431, %v1584, 0.0
    %1589 = vadd.xlane.f32.xlu0 %v1588
    %v1590 = vpop.xlane.xlu0 %1589
    %v1591 = vsel %vm431, %v1585, 0.0
    %1592 = vadd.xlane.f32.xlu0 %v1591
    %v1593 = vpop.xlane.xlu0 %1592
    %v1594 = vmul.f32 %v1590, %v880
    %v1595 = vmul.f32 %v1593, %v880
    %v1596 = vsub.f32 %v1584, %v1594
    %v1597 = vsub.f32 %v1585, %v1595
    %v1598 = vmul.f32 %v1596, %v1596
    %v1599 = vmul.f32 %v1597, %v1597
    %v1600 = vsel %vm431, %v1598, 0.0
    %1601 = vadd.xlane.f32.xlu0 %v1600
    %v1602 = vpop.xlane.xlu0 %1601
    %v1603 = vsel %vm431, %v1599, 0.0
    %1604 = vadd.xlane.f32.xlu0 %v1603
    %v1605 = vpop.xlane.xlu0 %1604
    %v1606 = vmul.f32 %v1602, %v880
    %v1607 = vmul.f32 %v1605, %v880
    %v1608 = vadd.f32 %v1606, 1e-05
    %v1609 = vadd.f32 %v1607, 1e-05
    %v1610 = vrsqrt.pop %v1608
    %v1611 = vmul.f32 %v1610, %v1608
    %v1612 = vmul.f32 %v1611, %v1610
    %v1613 = vmul.f32 0.5, %v1612
    %v1614 = vsub.f32 1.5, %v1613
    %v1615 = vmul.f32 %v1610, %v1614
    %vm1616 = vweird.f32 %v1608
    %vm1617 = vweird.f32 %v1610
    %vm1618 = vmor %vm1616, %vm1617
    %v1619 = vsel %vm1618, %v1610, %v1615
    %v1620 = vrsqrt.pop %v1609
    %v1621 = vmul.f32 %v1620, %v1609
    %v1622 = vmul.f32 %v1621, %v1620
    %v1623 = vmul.f32 0.5, %v1622
    %v1624 = vsub.f32 1.5, %v1623
    %v1625 = vmul.f32 %v1620, %v1624
    %vm1626 = vweird.f32 %v1609
    %vm1627 = vweird.f32 %v1620
    %vm1628 = vmor %vm1626, %vm1627
    %v1629 = vsel %vm1628, %v1620, %v1625
    %v1630 = vmul.f32 %v1596, %v1619
    %v1631 = vmul.f32 %v1597, %v1629
    %v1633 = vperm.slane %v1586, 0
    %v1635 = vmul.f32 %v1630, %v1633
    %v1636 = vmul.f32 %v1631, %v1633
    %v1638 = vperm.slane %v1587, 0
    %v1640 = vadd.f32 %v1635, %v1638
    %v1641 = vadd.f32 %v1636, %v1638
    %v1642 = vmul.f32 %v1640, %v932
    %v1643 = vmul.f32 %v1641, %v937
    %1644 = vst.msk [vmem:[#allocation29] sm:$0xff] %vm431, %v1642
    %1645 = vst.msk [vmem:[#allocation29 + $0x8] sm:$0xff] %vm431, %v1643
    // Predicated region
    $region190: #{tpu_custom_call.1} parent=1 // pred_check
      _
    $region191: #{tpu_custom_call.1} parent=1 // pred_check_branch
      %1647 = sbr.rel (0) target = $region193
    $region192: #{tpu_custom_call.1} parent=1 // pred_region
      %1649 = vsyncadd [#allocation5], 0
      %s1650 = sshll.u32 [#allocation29], 4
      %s1651 = int_to_ptr.vmem [resolvable:$true] %s1650
      %s1652 = sshll.u32 %s63, 4
      %s1653 = int_to_ptr.hbm [resolvable:$true] %s1652
      %1658 = dma.vmem_to_hbm [thread:$0]  %s1651, 256, %s1653, [#allocation5], 128, 128, 8
    $region193: #{tpu_custom_call.1} parent=1 // pred_fallthru
      _
    // Predicated region
    $region194: #{tpu_custom_call.1} parent=1 // pred_check
      _
    $region195: #{tpu_custom_call.1} parent=1 // pred_check_branch
      %1660 = sbr.rel (0) target = $region197
    $region196: #{tpu_custom_call.1} parent=1 // pred_region
      %1662 = vsyncadd [#allocation31], 0
      %s1663 = sshll.u32 [#allocation30], 4
      %s1664 = int_to_ptr.vmem [resolvable:$true] %s1663
      %s1665 = sshll.u32 %s65, 4
      %s1666 = int_to_ptr.hbm [resolvable:$true] %s1665
      %1671 = dma.vmem_to_hbm [thread:$0]  %s1664, 256, %s1666, [#allocation31], 64, 64, 4
    $region197: #{tpu_custom_call.1} parent=1 // pred_fallthru
      _
    // Predicated region
    $region198: #{tpu_custom_call.1} parent=1 // pred_check
      _
    $region199: #{tpu_custom_call.1} parent=1 // pred_check_branch
      %1673 = sbr.rel (0) target = $region201
    $region200: #{tpu_custom_call.1} parent=1 // pred_region
      %1675 = vsyncadd [#allocation31], 0
      %s1676 = sshll.u32 [#allocation32], 4
      %s1677 = int_to_ptr.vmem [resolvable:$true] %s1676
      %s1678 = sshll.u32 %s67, 4
      %s1679 = int_to_ptr.hbm [resolvable:$true] %s1678
      %1684 = dma.vmem_to_hbm [thread:$0]  %s1677, 256, %s1679, [#allocation31], 64, 64, 4
    $region201: #{tpu_custom_call.1} parent=1 // pred_fallthru
      _
    // Predicated region
    $region202: #{tpu_custom_call.1} parent=1 // pred_check
      _
    $region203: #{tpu_custom_call.1} parent=1 // pred_check_branch
      %1686 = sbr.rel (0) target = $region205
    $region204: #{tpu_custom_call.1} parent=1 // pred_region
      %1688 = dma.done [#allocation5], 256
    $region205: #{tpu_custom_call.1} parent=1 // pred_fallthru
      _
    // Predicated region
    $region206: #{tpu_custom_call.1} parent=1 // pred_check
      _
    $region207: #{tpu_custom_call.1} parent=1 // pred_check_branch
      %1690 = sbr.rel (0) target = $region209
    $region208: #{tpu_custom_call.1} parent=1 // pred_region
      %1692 = dma.done [#allocation31], 256
    $region209: #{tpu_custom_call.1} parent=1 // pred_fallthru
      _
    // Predicated region
    $region210: #{tpu_custom_call.1} parent=1 // pred_check
      _
    $region211: #{tpu_custom_call.1} parent=1 // pred_check_branch
      %1694 = sbr.rel (0) target = $region213
    $region212: #{tpu_custom_call.1} parent=1 // pred_region
      %1696 = dma.done [#allocation31], 256
    $region213: #{tpu_custom_call.1} parent=1 // pred_fallthru
      _
    %1697 = vsyncpa [#allocation4], 1
    %1698 = vsyncpa [#allocation7], 1
    %1699 = vsyncpa [#allocation10], 1
    %1700 = vsyncpa [#allocation13], 1
    %1701 = vsyncpa [#allocation16], 1
    %1702 = vsyncpa [#allocation19], 1
    %1703 = vsyncpa [#allocation22], 1
    %1704 = vsyncpa [#allocation25], 1
    %1705 = vsyncpa [#allocation28], 1
    %1706 = vsyncpa [#allocation5], 1
    %1707 = vsyncpa [#allocation31], 1

</llo_original>
